<compile_context>
chip_gen: v5e
topology: v5e:2x2
jax: 0.10.0
libtpu: 0.0.40
codegen_flags: <defaults>
</compile_context>

<pallas_src>
import functools

import numpy as np
import jax
import jax.numpy as jnp
from jax.experimental import pallas as pl
from jax.experimental.pallas import tpu as pltpu


def _resblock_kernel(x_ref, wb_ref, bias_ref, g_ref, beta_ref,
                     ones_ref, sel_ref, bsel_ref, o_ref, xp_ref,
                     *, N, H, W, C, K, eps):
    """Whole ResBlock forward in one invocation (everything in VMEM).

    x_ref    : (N*H, W*C)          input activations, lane-dense NHWC slab
    wb_ref   : (K, W*C, W*C)       banded conv matrices (one per kernel row)
    bias_ref : (1, W*C)            conv bias tiled along the lane axis
    g_ref    : (3, C)              BN gammas (bn1, bn2, bn3)
    beta_ref : (3, C)              BN betas
    ones_ref : (1, N*H)            ones row for MXU row-reduction
    sel_ref  : (W*C, C)            one-hot channel selector (lane -> channel)
    bsel_ref : (C, W*C)            sel^T, broadcasts (1,C) -> (1,W*C)
    o_ref    : (N*H, W*C)          output slab
    xp_ref   : (N, H+2*pad, W*C)   H-halo scratch for 'same' zero padding
    """
    pad = K // 2
    WC = W * C
    NH = N * H
    inv_cnt = 1.0 / float(N * H * W)

    # Zero the whole padded scratch ONCE.  Valid because the interior rows
    # are fully rewritten before every conv and the halo rows are never
    # written inside the kernel.
    xp_ref[...] = jnp.zeros_like(xp_ref)

    def conv_relu(y):
        # y: (N*H, W*C) lane-dense.  Write the interior as one wide slab.
        xp_ref[:, pad:pad + H, :] = y.reshape(N, H, WC)
        # 'same' cross-correlation (== PyTorch Conv2d) as K banded matmuls:
        #   out[(n,h), wo*C+co] = sum_dy  xp[n, h+dy, :] @ B[dy]
        acc = jnp.dot(xp_ref[:, 0:H, :].reshape(NH, WC), wb_ref[0],
                      preferred_element_type=jnp.float32)
        for dy in range(1, K):
            acc = acc + jnp.dot(xp_ref[:, dy:dy + H, :].reshape(NH, WC),
                                wb_ref[dy], preferred_element_type=jnp.float32)
        return jnp.maximum(acc + bias_ref[...], 0.0)          # bias + ReLU

    def batchnorm(y, idx):
        # Training-mode BN, per-channel stats over (N, H, W), biased var.
        # Channel sums go through the MXU (ones-row reduce, one-hot select)
        # instead of cross-sublane XLU reductions.
        def ch_sums(v):
            rowsum = jnp.dot(ones_ref[...], v,
                             preferred_element_type=jnp.float32)        # (1, WC)
            return jnp.dot(rowsum, sel_ref[...],
                           preferred_element_type=jnp.float32)          # (1, C)

        s1 = ch_sums(y)
        s2 = ch_sums(y * y)
        mean = s1 * inv_cnt
        # One-pass biased variance; safe here because eps == planes (=4.0,
        # the BatchNorm2d(inplane, planes) quirk) dominates the denominator.
        var = jnp.maximum(s2 * inv_cnt - mean * mean, 0.0)
        scale_c = g_ref[idx:idx + 1, :] * jax.lax.rsqrt(var + eps)      # (1, C)
        shift_c = beta_ref[idx:idx + 1, :] - mean * scale_c             # (1, C)
        # Broadcast per-channel scale/shift to lane width with one MXU op.
        ss = jnp.dot(jnp.concatenate([scale_c, shift_c], axis=0),
                     bsel_ref[...], preferred_element_type=jnp.float32)  # (2, WC)
        return y * ss[0:1, :] + ss[1:2, :]

    y = conv_relu(x_ref[...])
    y = batchnorm(y, 0)
    y = conv_relu(y)           # BN scale/shift fuses into this interior write
    y = batchnorm(y, 1)
    y = conv_relu(y)
    y = batchnorm(y, 2)

    o_ref[...] = y             # lane-dense writeback; NCHW transpose in wrapper


def _build_banded_weights(w_kkio, W):
    """(K, K, Cin, Cout) taps -> (K, W*Cin, W*Cout) banded matrices.

    B[dy, wi*Cin+ci, wo*Cout+co] = w[dy, wi-wo+pad, ci, co] when the dx tap
    is in range, else 0 -- this also encodes the zero 'same' padding along W.
    """
    K, K2, Cin, Cout = w_kkio.shape
    pad = K // 2
    w_np = np.asarray(w_kkio, np.float32)
    B = np.zeros((K, W * Cin, W * Cout), np.float32)
    for dy in range(K):
        for dx in range(K):
            for wo in range(W):
                wi = wo + dx - pad
                if 0 <= wi < W:
                    B[dy, wi * Cin:(wi + 1) * Cin,
                      wo * Cout:(wo + 1) * Cout] = w_np[dy, dx]
    return jnp.asarray(B)


def resblock_forward(x_nchw, w_kkio, bias, gammas, betas, *, eps):
    """x_nchw: (N, C, H, W) float32 -> (N, C, H, W) float32."""
    N, C, H, W = x_nchw.shape
    K, K2, Cin, Cout = w_kkio.shape
    assert K == K2 and K % 2 == 1, "only odd 'same' kernels supported"
    assert Cin == C and Cout == C, "ResBlock reuses conv1 -> inplane == planes"
    pad = K // 2
    WC = W * C
    NH = N * H

    # NCHW -> lane-dense NHWC slab (N*H, W*C); channels+width on the lane axis.
    x_slab = jnp.transpose(x_nchw, (0, 2, 3, 1)).astype(jnp.float32).reshape(NH, WC)

    B = _build_banded_weights(w_kkio, W)                                   # (K, WC, WC)
    bias_t = jnp.tile(jnp.asarray(bias, jnp.float32).reshape(1, Cout), (1, W))  # (1, WC)
    ones_nh = jnp.ones((1, NH), jnp.float32)
    sel_np = np.tile(np.eye(C, dtype=np.float32), (W, 1))                  # (WC, C)
    sel = jnp.asarray(sel_np)
    bsel = jnp.asarray(np.ascontiguousarray(sel_np.T))                     # (C, WC)
    g = jnp.asarray(gammas, jnp.float32)
    bt = jnp.asarray(betas, jnp.float32)

    kernel = functools.partial(_resblock_kernel,
                               N=N, H=H, W=W, C=C, K=K, eps=float(eps))

    total = N * H * W * C
    cost = pl.CostEstimate(
        flops=int(3 * K * 2 * NH * WC * WC + 3 * 12 * total),
        transcendentals=int(3 * C),
        bytes_accessed=int(4 * (2 * total + K * WC * WC + 4 * NH * WC)))

    out_slab = pl.pallas_call(
        kernel,
        out_shape=jax.ShapeDtypeStruct((NH, WC), jnp.float32),
        in_specs=[pl.BlockSpec(memory_space=pltpu.MemorySpace.VMEM)] * 8,
        out_specs=pl.BlockSpec(memory_space=pltpu.MemorySpace.VMEM),
        scratch_shapes=[pltpu.VMEM((N, H + 2 * pad, WC), jnp.float32)],
        compiler_params=pltpu.CompilerParams(vmem_limit_bytes=32 * 1024 * 1024),
        cost_estimate=cost,
    )(x_slab, B, bias_t, g, bt, ones_nh, sel, bsel)

    return jnp.transpose(out_slab.reshape(N, H, W, C), (0, 3, 1, 2))


def _reference(x_nchw, w_torch, bias, gammas, betas, eps):
    """Pure-JAX reference replicating the PyTorch forward (training-mode BN)."""
    def conv(v):
        y = jax.lax.conv_general_dilated(
            v, w_torch, window_strides=(1, 1), padding="SAME",
            dimension_numbers=("NCHW", "OIHW", "NCHW"),
            precision=jax.lax.Precision.HIGHEST)
        return y + bias.reshape(1, -1, 1, 1)

    def bn(v, g, be):
        m = jnp.mean(v, axis=(0, 2, 3), keepdims=True)
        var = jnp.mean((v - m) ** 2, axis=(0, 2, 3), keepdims=True)  # biased
        return (v - m) * jax.lax.rsqrt(var + eps) * g.reshape(1, -1, 1, 1) \
            + be.reshape(1, -1, 1, 1)

    y = x_nchw
    for i in range(3):
        y = bn(jnp.maximum(conv(y), 0.0), gammas[i], betas[i])
    return y


if __name__ == "__main__":
    # Small shapes consistent with the module: inplane = planes = 4, k = 3.
    N, C, H, W = 2, 4, 16, 16
    K = 3
    inplane = planes = C

    key = jax.random.PRNGKey(0)
    kx, kw, kb = jax.random.split(key, 3)

    x = jax.random.normal(kx, (N, C, H, W), jnp.float32)                 # NCHW

    # nn.Conv2d weight layout (Cout, Cin, KH, KW); reorder to (KH, KW, Cin, Cout).
    w_torch = jax.random.normal(kw, (planes, inplane, K, K), jnp.float32) * 0.1
    w_kkio = jnp.transpose(w_torch, (2, 3, 1, 0))
    b = jax.random.normal(kb, (planes,), jnp.float32) * 0.1

    # BatchNorm2d default affine init (weight=1, bias=0) for bn1, bn2, bn3.
    gammas = jnp.ones((3, planes), jnp.float32)
    betas = jnp.zeros((3, planes), jnp.float32)

    # BatchNorm2d(inplane, planes) -> eps = planes (positional-arg quirk).
    eps = float(planes)

    out = resblock_forward(x, w_kkio, b, gammas, betas, eps=eps)
    out = jax.block_until_ready(out)

    ref = _reference(x, w_torch, b, gammas, betas, eps)

    assert out.shape == (N, C, H, W)
    assert jnp.all(jnp.isfinite(out))
    assert jnp.allclose(out, ref, rtol=2e-2, atol=2e-2), (
        "max abs err = %f" % float(jnp.max(jnp.abs(out - ref))))
    print("KERNEL_OK")
</pallas_src>

<mosaic_0001>
module attributes {stable_mosaic.version = 11 : i64} {
  func.func @_resblock_kernel(%arg0: memref<32x64xf32, #tpu.memory_space<vmem>>, %arg1: memref<3x64x64xf32, #tpu.memory_space<vmem>>, %arg2: memref<1x64xf32, #tpu.memory_space<vmem>>, %arg3: memref<3x4xf32, #tpu.memory_space<vmem>>, %arg4: memref<3x4xf32, #tpu.memory_space<vmem>>, %arg5: memref<1x32xf32, #tpu.memory_space<vmem>>, %arg6: memref<64x4xf32, #tpu.memory_space<vmem>>, %arg7: memref<4x64xf32, #tpu.memory_space<vmem>>, %arg8: memref<32x64xf32, #tpu.memory_space<vmem>>, %arg9: memref<2x18x64xf32, #tpu.memory_space<vmem>>) attributes {dimension_semantics = [], scalar_prefetch = 0 : i64, scratch_operands = 1 : i64, tpu.core_type = #tpu.core_type<tc>} {
    %cst = arith.constant 0.000000e+00 : f32
    %0 = vector.broadcast %cst : f32 to vector<2x18x64xf32>
    %c0 = arith.constant 0 : index
    %c0_0 = arith.constant 0 : index
    %c0_1 = arith.constant 0 : index
    %1 = vector.load %arg9[%c0, %c0_0, %c0_1] : memref<2x18x64xf32, #tpu.memory_space<vmem>>, vector<2x18x64xf32>
    tpu.vector_store %arg9[%c0, %c0_0, %c0_1], %0 {strides = array<i32>} : memref<2x18x64xf32, #tpu.memory_space<vmem>>, vector<2x18x64xf32>,
    %c0_2 = arith.constant 0 : index
    %c0_3 = arith.constant 0 : index
    %2 = vector.load %arg0[%c0_2, %c0_3] : memref<32x64xf32, #tpu.memory_space<vmem>>, vector<32x64xf32>
    %3 = vector.shape_cast %2 : vector<32x64xf32> to vector<2x16x64xf32>
    %c0_4 = arith.constant 0 : index
    %c1 = arith.constant 1 : index
    %c0_5 = arith.constant 0 : index
    %4 = vector.load %arg9[%c0_4, %c1, %c0_5] : memref<2x18x64xf32, #tpu.memory_space<vmem>>, vector<2x16x64xf32>
    tpu.vector_store %arg9[%c0_4, %c1, %c0_5], %3 {strides = array<i32>} : memref<2x18x64xf32, #tpu.memory_space<vmem>>, vector<2x16x64xf32>,
    %c0_6 = arith.constant 0 : index
    %c0_7 = arith.constant 0 : index
    %c0_8 = arith.constant 0 : index
    %5 = vector.load %arg9[%c0_6, %c0_7, %c0_8] : memref<2x18x64xf32, #tpu.memory_space<vmem>>, vector<2x16x64xf32>
    %6 = vector.shape_cast %5 : vector<2x16x64xf32> to vector<32x64xf32>
    %c0_9 = arith.constant 0 : index
    %c0_10 = arith.constant 0 : index
    %c0_11 = arith.constant 0 : index
    %7 = vector.load %arg1[%c0_9, %c0_10, %c0_11] : memref<3x64x64xf32, #tpu.memory_space<vmem>>, vector<1x64x64xf32>
    %8 = vector.shape_cast %7 : vector<1x64x64xf32> to vector<64x64xf32>
    %cst_12 = arith.constant dense<0.000000e+00> : vector<32x64xf32>
    %9 = tpu.matmul %6, %8, %cst_12 {dimension_numbers = #tpu.dot_dimension_numbers<[1], [0], [0], [1], [0, 0, 1, 1], [], []>} : vector<32x64xf32>, vector<64x64xf32>, vector<32x64xf32> -> vector<32x64xf32>
    %c0_13 = arith.constant 0 : index
    %c1_14 = arith.constant 1 : index
    %c0_15 = arith.constant 0 : index
    %10 = vector.load %arg9[%c0_13, %c1_14, %c0_15] : memref<2x18x64xf32, #tpu.memory_space<vmem>>, vector<2x16x64xf32>
    %11 = vector.shape_cast %10 : vector<2x16x64xf32> to vector<32x64xf32>
    %c1_16 = arith.constant 1 : index
    %c0_17 = arith.constant 0 : index
    %c0_18 = arith.constant 0 : index
    %12 = vector.load %arg1[%c1_16, %c0_17, %c0_18] : memref<3x64x64xf32, #tpu.memory_space<vmem>>, vector<1x64x64xf32>
    %13 = vector.shape_cast %12 : vector<1x64x64xf32> to vector<64x64xf32>
    %cst_19 = arith.constant dense<0.000000e+00> : vector<32x64xf32>
    %14 = tpu.matmul %11, %13, %cst_19 {dimension_numbers = #tpu.dot_dimension_numbers<[1], [0], [0], [1], [0, 0, 1, 1], [], []>} : vector<32x64xf32>, vector<64x64xf32>, vector<32x64xf32> -> vector<32x64xf32>
    %15 = arith.addf %9, %14 : vector<32x64xf32>
    %c0_20 = arith.constant 0 : index
    %c2 = arith.constant 2 : index
    %c0_21 = arith.constant 0 : index
    %16 = vector.load %arg9[%c0_20, %c2, %c0_21] : memref<2x18x64xf32, #tpu.memory_space<vmem>>, vector<2x16x64xf32>
    %17 = vector.shape_cast %16 : vector<2x16x64xf32> to vector<32x64xf32>
    %c2_22 = arith.constant 2 : index
    %c0_23 = arith.constant 0 : index
    %c0_24 = arith.constant 0 : index
    %18 = vector.load %arg1[%c2_22, %c0_23, %c0_24] : memref<3x64x64xf32, #tpu.memory_space<vmem>>, vector<1x64x64xf32>
    %19 = vector.shape_cast %18 : vector<1x64x64xf32> to vector<64x64xf32>
    %cst_25 = arith.constant dense<0.000000e+00> : vector<32x64xf32>
    %20 = tpu.matmul %17, %19, %cst_25 {dimension_numbers = #tpu.dot_dimension_numbers<[1], [0], [0], [1], [0, 0, 1, 1], [], []>} : vector<32x64xf32>, vector<64x64xf32>, vector<32x64xf32> -> vector<32x64xf32>
    %21 = arith.addf %15, %20 : vector<32x64xf32>
    %c0_26 = arith.constant 0 : index
    %c0_27 = arith.constant 0 : index
    %22 = vector.load %arg2[%c0_26, %c0_27] : memref<1x64xf32, #tpu.memory_space<vmem>>, vector<1x64xf32>
    %23 = vector.broadcast %22 : vector<1x64xf32> to vector<32x64xf32>
    %24 = arith.addf %21, %23 : vector<32x64xf32>
    %cst_28 = arith.constant 0.000000e+00 : f32
    %25 = vector.broadcast %cst_28 : f32 to vector<32x64xf32>
    %26 = arith.maximumf %24, %25 : vector<32x64xf32>
    %c0_29 = arith.constant 0 : index
    %c0_30 = arith.constant 0 : index
    %27 = vector.load %arg5[%c0_29, %c0_30] : memref<1x32xf32, #tpu.memory_space<vmem>>, vector<1x32xf32>
    %cst_31 = arith.constant dense<0.000000e+00> : vector<1x64xf32>
    %28 = tpu.matmul %27, %26, %cst_31 {dimension_numbers = #tpu.dot_dimension_numbers<[1], [0], [0], [1], [0, 0, 1, 1], [], []>} : vector<1x32xf32>, vector<32x64xf32>, vector<1x64xf32> -> vector<1x64xf32>
    %c0_32 = arith.constant 0 : index
    %c0_33 = arith.constant 0 : index
    %29 = vector.load %arg6[%c0_32, %c0_33] : memref<64x4xf32, #tpu.memory_space<vmem>>, vector<64x4xf32>
    %cst_34 = arith.constant dense<0.000000e+00> : vector<1x4xf32>
    %30 = tpu.matmul %28, %29, %cst_34 {dimension_numbers = #tpu.dot_dimension_numbers<[1], [0], [0], [1], [0, 0, 1, 1], [], []>} : vector<1x64xf32>, vector<64x4xf32>, vector<1x4xf32> -> vector<1x4xf32>
    %31 = arith.mulf %26, %26 : vector<32x64xf32>
    %c0_35 = arith.constant 0 : index
    %c0_36 = arith.constant 0 : index
    %32 = vector.load %arg5[%c0_35, %c0_36] : memref<1x32xf32, #tpu.memory_space<vmem>>, vector<1x32xf32>
    %cst_37 = arith.constant dense<0.000000e+00> : vector<1x64xf32>
    %33 = tpu.matmul %32, %31, %cst_37 {dimension_numbers = #tpu.dot_dimension_numbers<[1], [0], [0], [1], [0, 0, 1, 1], [], []>} : vector<1x32xf32>, vector<32x64xf32>, vector<1x64xf32> -> vector<1x64xf32>
    %c0_38 = arith.constant 0 : index
    %c0_39 = arith.constant 0 : index
    %34 = vector.load %arg6[%c0_38, %c0_39] : memref<64x4xf32, #tpu.memory_space<vmem>>, vector<64x4xf32>
    %cst_40 = arith.constant dense<0.000000e+00> : vector<1x4xf32>
    %35 = tpu.matmul %33, %34, %cst_40 {dimension_numbers = #tpu.dot_dimension_numbers<[1], [0], [0], [1], [0, 0, 1, 1], [], []>} : vector<1x64xf32>, vector<64x4xf32>, vector<1x4xf32> -> vector<1x4xf32>
    %cst_41 = arith.constant 0.001953125 : f32
    %36 = vector.broadcast %cst_41 : f32 to vector<1x4xf32>
    %37 = arith.mulf %30, %36 : vector<1x4xf32>
    %cst_42 = arith.constant 0.001953125 : f32
    %38 = vector.broadcast %cst_42 : f32 to vector<1x4xf32>
    %39 = arith.mulf %35, %38 : vector<1x4xf32>
    %40 = arith.mulf %37, %37 : vector<1x4xf32>
    %41 = arith.subf %39, %40 : vector<1x4xf32>
    %cst_43 = arith.constant 0.000000e+00 : f32
    %42 = vector.broadcast %cst_43 : f32 to vector<1x4xf32>
    %43 = arith.maximumf %41, %42 : vector<1x4xf32>
    %c0_44 = arith.constant 0 : index
    %c0_45 = arith.constant 0 : index
    %44 = vector.load %arg3[%c0_44, %c0_45] : memref<3x4xf32, #tpu.memory_space<vmem>>, vector<1x4xf32>
    %cst_46 = arith.constant 4.000000e+00 : f32
    %45 = vector.broadcast %cst_46 : f32 to vector<1x4xf32>
    %46 = arith.addf %43, %45 : vector<1x4xf32>
    %47 = math.rsqrt %46 : vector<1x4xf32>
    %48 = arith.mulf %44, %47 : vector<1x4xf32>
    %c0_47 = arith.constant 0 : index
    %c0_48 = arith.constant 0 : index
    %49 = vector.load %arg4[%c0_47, %c0_48] : memref<3x4xf32, #tpu.memory_space<vmem>>, vector<1x4xf32>
    %50 = arith.mulf %37, %48 : vector<1x4xf32>
    %51 = arith.subf %49, %50 : vector<1x4xf32>
    %52 = tpu.concatenate %48, %51 in 0 : vector<1x4xf32>, vector<1x4xf32> -> vector<2x4xf32>
    %c0_49 = arith.constant 0 : index
    %c0_50 = arith.constant 0 : index
    %53 = vector.load %arg7[%c0_49, %c0_50] : memref<4x64xf32, #tpu.memory_space<vmem>>, vector<4x64xf32>
    %cst_51 = arith.constant dense<0.000000e+00> : vector<2x64xf32>
    %54 = tpu.matmul %52, %53, %cst_51 {dimension_numbers = #tpu.dot_dimension_numbers<[1], [0], [0], [1], [0, 0, 1, 1], [], []>} : vector<2x4xf32>, vector<4x64xf32>, vector<2x64xf32> -> vector<2x64xf32>
    %55 = vector.extract_strided_slice %54 {offsets = [0, 0], sizes = [1, 64], strides = [1, 1]} : vector<2x64xf32> to vector<1x64xf32>
    %56 = vector.broadcast %55 : vector<1x64xf32> to vector<32x64xf32>
    %57 = arith.mulf %26, %56 : vector<32x64xf32>
    %58 = vector.extract_strided_slice %54 {offsets = [1, 0], sizes = [1, 64], strides = [1, 1]} : vector<2x64xf32> to vector<1x64xf32>
    %59 = vector.broadcast %58 : vector<1x64xf32> to vector<32x64xf32>
    %60 = arith.addf %57, %59 : vector<32x64xf32>
    %61 = vector.shape_cast %60 : vector<32x64xf32> to vector<2x16x64xf32>
    %c0_52 = arith.constant 0 : index
    %c1_53 = arith.constant 1 : index
    %c0_54 = arith.constant 0 : index
    %62 = vector.load %arg9[%c0_52, %c1_53, %c0_54] : memref<2x18x64xf32, #tpu.memory_space<vmem>>, vector<2x16x64xf32>
    tpu.vector_store %arg9[%c0_52, %c1_53, %c0_54], %61 {strides = array<i32>} : memref<2x18x64xf32, #tpu.memory_space<vmem>>, vector<2x16x64xf32>,
    %c0_55 = arith.constant 0 : index
    %c0_56 = arith.constant 0 : index
    %c0_57 = arith.constant 0 : index
    %63 = vector.load %arg9[%c0_55, %c0_56, %c0_57] : memref<2x18x64xf32, #tpu.memory_space<vmem>>, vector<2x16x64xf32>
    %64 = vector.shape_cast %63 : vector<2x16x64xf32> to vector<32x64xf32>
    %c0_58 = arith.constant 0 : index
    %c0_59 = arith.constant 0 : index
    %c0_60 = arith.constant 0 : index
    %65 = vector.load %arg1[%c0_58, %c0_59, %c0_60] : memref<3x64x64xf32, #tpu.memory_space<vmem>>, vector<1x64x64xf32>
    %66 = vector.shape_cast %65 : vector<1x64x64xf32> to vector<64x64xf32>
    %cst_61 = arith.constant dense<0.000000e+00> : vector<32x64xf32>
    %67 = tpu.matmul %64, %66, %cst_61 {dimension_numbers = #tpu.dot_dimension_numbers<[1], [0], [0], [1], [0, 0, 1, 1], [], []>} : vector<32x64xf32>, vector<64x64xf32>, vector<32x64xf32> -> vector<32x64xf32>
    %c0_62 = arith.constant 0 : index
    %c1_63 = arith.constant 1 : index
    %c0_64 = arith.constant 0 : index
    %68 = vector.load %arg9[%c0_62, %c1_63, %c0_64] : memref<2x18x64xf32, #tpu.memory_space<vmem>>, vector<2x16x64xf32>
    %69 = vector.shape_cast %68 : vector<2x16x64xf32> to vector<32x64xf32>
    %c1_65 = arith.constant 1 : index
    %c0_66 = arith.constant 0 : index
    %c0_67 = arith.constant 0 : index
    %70 = vector.load %arg1[%c1_65, %c0_66, %c0_67] : memref<3x64x64xf32, #tpu.memory_space<vmem>>, vector<1x64x64xf32>
    %71 = vector.shape_cast %70 : vector<1x64x64xf32> to vector<64x64xf32>
    %cst_68 = arith.constant dense<0.000000e+00> : vector<32x64xf32>
    %72 = tpu.matmul %69, %71, %cst_68 {dimension_numbers = #tpu.dot_dimension_numbers<[1], [0], [0], [1], [0, 0, 1, 1], [], []>} : vector<32x64xf32>, vector<64x64xf32>, vector<32x64xf32> -> vector<32x64xf32>
    %73 = arith.addf %67, %72 : vector<32x64xf32>
    %c0_69 = arith.constant 0 : index
    %c2_70 = arith.constant 2 : index
    %c0_71 = arith.constant 0 : index
    %74 = vector.load %arg9[%c0_69, %c2_70, %c0_71] : memref<2x18x64xf32, #tpu.memory_space<vmem>>, vector<2x16x64xf32>
    %75 = vector.shape_cast %74 : vector<2x16x64xf32> to vector<32x64xf32>
    %c2_72 = arith.constant 2 : index
    %c0_73 = arith.constant 0 : index
    %c0_74 = arith.constant 0 : index
    %76 = vector.load %arg1[%c2_72, %c0_73, %c0_74] : memref<3x64x64xf32, #tpu.memory_space<vmem>>, vector<1x64x64xf32>
    %77 = vector.shape_cast %76 : vector<1x64x64xf32> to vector<64x64xf32>
    %cst_75 = arith.constant dense<0.000000e+00> : vector<32x64xf32>
    %78 = tpu.matmul %75, %77, %cst_75 {dimension_numbers = #tpu.dot_dimension_numbers<[1], [0], [0], [1], [0, 0, 1, 1], [], []>} : vector<32x64xf32>, vector<64x64xf32>, vector<32x64xf32> -> vector<32x64xf32>
    %79 = arith.addf %73, %78 : vector<32x64xf32>
    %c0_76 = arith.constant 0 : index
    %c0_77 = arith.constant 0 : index
    %80 = vector.load %arg2[%c0_76, %c0_77] : memref<1x64xf32, #tpu.memory_space<vmem>>, vector<1x64xf32>
    %81 = vector.broadcast %80 : vector<1x64xf32> to vector<32x64xf32>
    %82 = arith.addf %79, %81 : vector<32x64xf32>
    %cst_78 = arith.constant 0.000000e+00 : f32
    %83 = vector.broadcast %cst_78 : f32 to vector<32x64xf32>
    %84 = arith.maximumf %82, %83 : vector<32x64xf32>
    %c0_79 = arith.constant 0 : index
    %c0_80 = arith.constant 0 : index
    %85 = vector.load %arg5[%c0_79, %c0_80] : memref<1x32xf32, #tpu.memory_space<vmem>>, vector<1x32xf32>
    %cst_81 = arith.constant dense<0.000000e+00> : vector<1x64xf32>
    %86 = tpu.matmul %85, %84, %cst_81 {dimension_numbers = #tpu.dot_dimension_numbers<[1], [0], [0], [1], [0, 0, 1, 1], [], []>} : vector<1x32xf32>, vector<32x64xf32>, vector<1x64xf32> -> vector<1x64xf32>
    %c0_82 = arith.constant 0 : index
    %c0_83 = arith.constant 0 : index
    %87 = vector.load %arg6[%c0_82, %c0_83] : memref<64x4xf32, #tpu.memory_space<vmem>>, vector<64x4xf32>
    %cst_84 = arith.constant dense<0.000000e+00> : vector<1x4xf32>
    %88 = tpu.matmul %86, %87, %cst_84 {dimension_numbers = #tpu.dot_dimension_numbers<[1], [0], [0], [1], [0, 0, 1, 1], [], []>} : vector<1x64xf32>, vector<64x4xf32>, vector<1x4xf32> -> vector<1x4xf32>
    %89 = arith.mulf %84, %84 : vector<32x64xf32>
    %c0_85 = arith.constant 0 : index
    %c0_86 = arith.constant 0 : index
    %90 = vector.load %arg5[%c0_85, %c0_86] : memref<1x32xf32, #tpu.memory_space<vmem>>, vector<1x32xf32>
    %cst_87 = arith.constant dense<0.000000e+00> : vector<1x64xf32>
    %91 = tpu.matmul %90, %89, %cst_87 {dimension_numbers = #tpu.dot_dimension_numbers<[1], [0], [0], [1], [0, 0, 1, 1], [], []>} : vector<1x32xf32>, vector<32x64xf32>, vector<1x64xf32> -> vector<1x64xf32>
    %c0_88 = arith.constant 0 : index
    %c0_89 = arith.constant 0 : index
    %92 = vector.load %arg6[%c0_88, %c0_89] : memref<64x4xf32, #tpu.memory_space<vmem>>, vector<64x4xf32>
    %cst_90 = arith.constant dense<0.000000e+00> : vector<1x4xf32>
    %93 = tpu.matmul %91, %92, %cst_90 {dimension_numbers = #tpu.dot_dimension_numbers<[1], [0], [0], [1], [0, 0, 1, 1], [], []>} : vector<1x64xf32>, vector<64x4xf32>, vector<1x4xf32> -> vector<1x4xf32>
    %cst_91 = arith.constant 0.001953125 : f32
    %94 = vector.broadcast %cst_91 : f32 to vector<1x4xf32>
    %95 = arith.mulf %88, %94 : vector<1x4xf32>
    %cst_92 = arith.constant 0.001953125 : f32
    %96 = vector.broadcast %cst_92 : f32 to vector<1x4xf32>
    %97 = arith.mulf %93, %96 : vector<1x4xf32>
    %98 = arith.mulf %95, %95 : vector<1x4xf32>
    %99 = arith.subf %97, %98 : vector<1x4xf32>
    %cst_93 = arith.constant 0.000000e+00 : f32
    %100 = vector.broadcast %cst_93 : f32 to vector<1x4xf32>
    %101 = arith.maximumf %99, %100 : vector<1x4xf32>
    %c1_94 = arith.constant 1 : index
    %c0_95 = arith.constant 0 : index
    %102 = vector.load %arg3[%c1_94, %c0_95] : memref<3x4xf32, #tpu.memory_space<vmem>>, vector<1x4xf32>
    %cst_96 = arith.constant 4.000000e+00 : f32
    %103 = vector.broadcast %cst_96 : f32 to vector<1x4xf32>
    %104 = arith.addf %101, %103 : vector<1x4xf32>
    %105 = math.rsqrt %104 : vector<1x4xf32>
    %106 = arith.mulf %102, %105 : vector<1x4xf32>
    %c1_97 = arith.constant 1 : index
    %c0_98 = arith.constant 0 : index
    %107 = vector.load %arg4[%c1_97, %c0_98] : memref<3x4xf32, #tpu.memory_space<vmem>>, vector<1x4xf32>
    %108 = arith.mulf %95, %106 : vector<1x4xf32>
    %109 = arith.subf %107, %108 : vector<1x4xf32>
    %110 = tpu.concatenate %106, %109 in 0 : vector<1x4xf32>, vector<1x4xf32> -> vector<2x4xf32>
    %c0_99 = arith.constant 0 : index
    %c0_100 = arith.constant 0 : index
    %111 = vector.load %arg7[%c0_99, %c0_100] : memref<4x64xf32, #tpu.memory_space<vmem>>, vector<4x64xf32>
    %cst_101 = arith.constant dense<0.000000e+00> : vector<2x64xf32>
    %112 = tpu.matmul %110, %111, %cst_101 {dimension_numbers = #tpu.dot_dimension_numbers<[1], [0], [0], [1], [0, 0, 1, 1], [], []>} : vector<2x4xf32>, vector<4x64xf32>, vector<2x64xf32> -> vector<2x64xf32>
    %113 = vector.extract_strided_slice %112 {offsets = [0, 0], sizes = [1, 64], strides = [1, 1]} : vector<2x64xf32> to vector<1x64xf32>
    %114 = vector.broadcast %113 : vector<1x64xf32> to vector<32x64xf32>
    %115 = arith.mulf %84, %114 : vector<32x64xf32>
    %116 = vector.extract_strided_slice %112 {offsets = [1, 0], sizes = [1, 64], strides = [1, 1]} : vector<2x64xf32> to vector<1x64xf32>
    %117 = vector.broadcast %116 : vector<1x64xf32> to vector<32x64xf32>
    %118 = arith.addf %115, %117 : vector<32x64xf32>
    %119 = vector.shape_cast %118 : vector<32x64xf32> to vector<2x16x64xf32>
    %c0_102 = arith.constant 0 : index
    %c1_103 = arith.constant 1 : index
    %c0_104 = arith.constant 0 : index
    %120 = vector.load %arg9[%c0_102, %c1_103, %c0_104] : memref<2x18x64xf32, #tpu.memory_space<vmem>>, vector<2x16x64xf32>
    tpu.vector_store %arg9[%c0_102, %c1_103, %c0_104], %119 {strides = array<i32>} : memref<2x18x64xf32, #tpu.memory_space<vmem>>, vector<2x16x64xf32>,
    %c0_105 = arith.constant 0 : index
    %c0_106 = arith.constant 0 : index
    %c0_107 = arith.constant 0 : index
    %121 = vector.load %arg9[%c0_105, %c0_106, %c0_107] : memref<2x18x64xf32, #tpu.memory_space<vmem>>, vector<2x16x64xf32>
    %122 = vector.shape_cast %121 : vector<2x16x64xf32> to vector<32x64xf32>
    %c0_108 = arith.constant 0 : index
    %c0_109 = arith.constant 0 : index
    %c0_110 = arith.constant 0 : index
    %123 = vector.load %arg1[%c0_108, %c0_109, %c0_110] : memref<3x64x64xf32, #tpu.memory_space<vmem>>, vector<1x64x64xf32>
    %124 = vector.shape_cast %123 : vector<1x64x64xf32> to vector<64x64xf32>
    %cst_111 = arith.constant dense<0.000000e+00> : vector<32x64xf32>
    %125 = tpu.matmul %122, %124, %cst_111 {dimension_numbers = #tpu.dot_dimension_numbers<[1], [0], [0], [1], [0, 0, 1, 1], [], []>} : vector<32x64xf32>, vector<64x64xf32>, vector<32x64xf32> -> vector<32x64xf32>
    %c0_112 = arith.constant 0 : index
    %c1_113 = arith.constant 1 : index
    %c0_114 = arith.constant 0 : index
    %126 = vector.load %arg9[%c0_112, %c1_113, %c0_114] : memref<2x18x64xf32, #tpu.memory_space<vmem>>, vector<2x16x64xf32>
    %127 = vector.shape_cast %126 : vector<2x16x64xf32> to vector<32x64xf32>
    %c1_115 = arith.constant 1 : index
    %c0_116 = arith.constant 0 : index
    %c0_117 = arith.constant 0 : index
    %128 = vector.load %arg1[%c1_115, %c0_116, %c0_117] : memref<3x64x64xf32, #tpu.memory_space<vmem>>, vector<1x64x64xf32>
    %129 = vector.shape_cast %128 : vector<1x64x64xf32> to vector<64x64xf32>
    %cst_118 = arith.constant dense<0.000000e+00> : vector<32x64xf32>
    %130 = tpu.matmul %127, %129, %cst_118 {dimension_numbers = #tpu.dot_dimension_numbers<[1], [0], [0], [1], [0, 0, 1, 1], [], []>} : vector<32x64xf32>, vector<64x64xf32>, vector<32x64xf32> -> vector<32x64xf32>
    %131 = arith.addf %125, %130 : vector<32x64xf32>
    %c0_119 = arith.constant 0 : index
    %c2_120 = arith.constant 2 : index
    %c0_121 = arith.constant 0 : index
    %132 = vector.load %arg9[%c0_119, %c2_120, %c0_121] : memref<2x18x64xf32, #tpu.memory_space<vmem>>, vector<2x16x64xf32>
    %133 = vector.shape_cast %132 : vector<2x16x64xf32> to vector<32x64xf32>
    %c2_122 = arith.constant 2 : index
    %c0_123 = arith.constant 0 : index
    %c0_124 = arith.constant 0 : index
    %134 = vector.load %arg1[%c2_122, %c0_123, %c0_124] : memref<3x64x64xf32, #tpu.memory_space<vmem>>, vector<1x64x64xf32>
    %135 = vector.shape_cast %134 : vector<1x64x64xf32> to vector<64x64xf32>
    %cst_125 = arith.constant dense<0.000000e+00> : vector<32x64xf32>
    %136 = tpu.matmul %133, %135, %cst_125 {dimension_numbers = #tpu.dot_dimension_numbers<[1], [0], [0], [1], [0, 0, 1, 1], [], []>} : vector<32x64xf32>, vector<64x64xf32>, vector<32x64xf32> -> vector<32x64xf32>
    %137 = arith.addf %131, %136 : vector<32x64xf32>
    %c0_126 = arith.constant 0 : index
    %c0_127 = arith.constant 0 : index
    %138 = vector.load %arg2[%c0_126, %c0_127] : memref<1x64xf32, #tpu.memory_space<vmem>>, vector<1x64xf32>
    %139 = vector.broadcast %138 : vector<1x64xf32> to vector<32x64xf32>
    %140 = arith.addf %137, %139 : vector<32x64xf32>
    %cst_128 = arith.constant 0.000000e+00 : f32
    %141 = vector.broadcast %cst_128 : f32 to vector<32x64xf32>
    %142 = arith.maximumf %140, %141 : vector<32x64xf32>
    %c0_129 = arith.constant 0 : index
    %c0_130 = arith.constant 0 : index
    %143 = vector.load %arg5[%c0_129, %c0_130] : memref<1x32xf32, #tpu.memory_space<vmem>>, vector<1x32xf32>
    %cst_131 = arith.constant dense<0.000000e+00> : vector<1x64xf32>
    %144 = tpu.matmul %143, %142, %cst_131 {dimension_numbers = #tpu.dot_dimension_numbers<[1], [0], [0], [1], [0, 0, 1, 1], [], []>} : vector<1x32xf32>, vector<32x64xf32>, vector<1x64xf32> -> vector<1x64xf32>
    %c0_132 = arith.constant 0 : index
    %c0_133 = arith.constant 0 : index
    %145 = vector.load %arg6[%c0_132, %c0_133] : memref<64x4xf32, #tpu.memory_space<vmem>>, vector<64x4xf32>
    %cst_134 = arith.constant dense<0.000000e+00> : vector<1x4xf32>
    %146 = tpu.matmul %144, %145, %cst_134 {dimension_numbers = #tpu.dot_dimension_numbers<[1], [0], [0], [1], [0, 0, 1, 1], [], []>} : vector<1x64xf32>, vector<64x4xf32>, vector<1x4xf32> -> vector<1x4xf32>
    %147 = arith.mulf %142, %142 : vector<32x64xf32>
    %c0_135 = arith.constant 0 : index
    %c0_136 = arith.constant 0 : index
    %148 = vector.load %arg5[%c0_135, %c0_136] : memref<1x32xf32, #tpu.memory_space<vmem>>, vector<1x32xf32>
    %cst_137 = arith.constant dense<0.000000e+00> : vector<1x64xf32>
    %149 = tpu.matmul %148, %147, %cst_137 {dimension_numbers = #tpu.dot_dimension_numbers<[1], [0], [0], [1], [0, 0, 1, 1], [], []>} : vector<1x32xf32>, vector<32x64xf32>, vector<1x64xf32> -> vector<1x64xf32>
    %c0_138 = arith.constant 0 : index
    %c0_139 = arith.constant 0 : index
    %150 = vector.load %arg6[%c0_138, %c0_139] : memref<64x4xf32, #tpu.memory_space<vmem>>, vector<64x4xf32>
    %cst_140 = arith.constant dense<0.000000e+00> : vector<1x4xf32>
    %151 = tpu.matmul %149, %150, %cst_140 {dimension_numbers = #tpu.dot_dimension_numbers<[1], [0], [0], [1], [0, 0, 1, 1], [], []>} : vector<1x64xf32>, vector<64x4xf32>, vector<1x4xf32> -> vector<1x4xf32>
    %cst_141 = arith.constant 0.001953125 : f32
    %152 = vector.broadcast %cst_141 : f32 to vector<1x4xf32>
    %153 = arith.mulf %146, %152 : vector<1x4xf32>
    %cst_142 = arith.constant 0.001953125 : f32
    %154 = vector.broadcast %cst_142 : f32 to vector<1x4xf32>
    %155 = arith.mulf %151, %154 : vector<1x4xf32>
    %156 = arith.mulf %153, %153 : vector<1x4xf32>
    %157 = arith.subf %155, %156 : vector<1x4xf32>
    %cst_143 = arith.constant 0.000000e+00 : f32
    %158 = vector.broadcast %cst_143 : f32 to vector<1x4xf32>
    %159 = arith.maximumf %157, %158 : vector<1x4xf32>
    %c2_144 = arith.constant 2 : index
    %c0_145 = arith.constant 0 : index
    %160 = vector.load %arg3[%c2_144, %c0_145] : memref<3x4xf32, #tpu.memory_space<vmem>>, vector<1x4xf32>
    %cst_146 = arith.constant 4.000000e+00 : f32
    %161 = vector.broadcast %cst_146 : f32 to vector<1x4xf32>
    %162 = arith.addf %159, %161 : vector<1x4xf32>
    %163 = math.rsqrt %162 : vector<1x4xf32>
    %164 = arith.mulf %160, %163 : vector<1x4xf32>
    %c2_147 = arith.constant 2 : index
    %c0_148 = arith.constant 0 : index
    %165 = vector.load %arg4[%c2_147, %c0_148] : memref<3x4xf32, #tpu.memory_space<vmem>>, vector<1x4xf32>
    %166 = arith.mulf %153, %164 : vector<1x4xf32>
    %167 = arith.subf %165, %166 : vector<1x4xf32>
    %168 = tpu.concatenate %164, %167 in 0 : vector<1x4xf32>, vector<1x4xf32> -> vector<2x4xf32>
    %c0_149 = arith.constant 0 : index
    %c0_150 = arith.constant 0 : index
    %169 = vector.load %arg7[%c0_149, %c0_150] : memref<4x64xf32, #tpu.memory_space<vmem>>, vector<4x64xf32>
    %cst_151 = arith.constant dense<0.000000e+00> : vector<2x64xf32>
    %170 = tpu.matmul %168, %169, %cst_151 {dimension_numbers = #tpu.dot_dimension_numbers<[1], [0], [0], [1], [0, 0, 1, 1], [], []>} : vector<2x4xf32>, vector<4x64xf32>, vector<2x64xf32> -> vector<2x64xf32>
    %171 = vector.extract_strided_slice %170 {offsets = [0, 0], sizes = [1, 64], strides = [1, 1]} : vector<2x64xf32> to vector<1x64xf32>
    %172 = vector.broadcast %171 : vector<1x64xf32> to vector<32x64xf32>
    %173 = arith.mulf %142, %172 : vector<32x64xf32>
    %174 = vector.extract_strided_slice %170 {offsets = [1, 0], sizes = [1, 64], strides = [1, 1]} : vector<2x64xf32> to vector<1x64xf32>
    %175 = vector.broadcast %174 : vector<1x64xf32> to vector<32x64xf32>
    %176 = arith.addf %173, %175 : vector<32x64xf32>
    %c0_152 = arith.constant 0 : index
    %c0_153 = arith.constant 0 : index
    %177 = vector.load %arg8[%c0_152, %c0_153] : memref<32x64xf32, #tpu.memory_space<vmem>>, vector<32x64xf32>
    tpu.vector_store %arg8[%c0_152, %c0_153], %176 {strides = array<i32>} : memref<32x64xf32, #tpu.memory_space<vmem>>, vector<32x64xf32>,
    return
  }
}

</mosaic_0001>

<llo_original>
// kernel: tpu_custom_call.1
$region0: #{tpu_custom_call.1}
  #allocation0 [shape = 'u32[]', space=smem, size = 0x4, offset = 0x4, fixed_abs, tag = 'smem constant byte address 0x4 - core index']
  #allocation1 [shape = 'u32[72,128]{1,0:T(1,128)}', space=vmem, size = 0x9000, scoped, tag = 'internal scratch']
  #allocation2 [shape = 'f32[2,18,64]{2,1,0:T(8,128)}', space=vmem, size = 0x6000, scoped, tag = 'scratch operand']
  %s0 = inlined_call_operand.vmem [shape: f32[32,64], index: 0, kind: input, shape index: {}]
  %s1 = inlined_call_operand.hbm [shape: f32[3,64,64], index: 1, kind: input, shape index: {}]
  %s2 = inlined_call_operand.vmem [shape: f32[1,64], index: 2, kind: input, shape index: {}]
  %s3 = inlined_call_operand.vmem [shape: f32[3,4], index: 3, kind: input, shape index: {}]
  %s4 = inlined_call_operand.vmem [shape: f32[3,4], index: 4, kind: input, shape index: {}]
  %s5 = inlined_call_operand.vmem [shape: f32[1,32], index: 5, kind: input, shape index: {}]
  %s6 = inlined_call_operand.vmem [shape: f32[64,4], index: 6, kind: input, shape index: {}]
  %s7 = inlined_call_operand.vmem [shape: f32[4,64], index: 7, kind: input, shape index: {}]
  %s8 = inlined_call_operand.hbm [shape: f32[32,64], index: 8, kind: output, shape index: {}]
  %s9 = sld [smem:[#allocation0]]
  $region46: #{tpu_custom_call.1} parent=0
    _
  %s11 = ssub.s32 1, %s9
  %s12 = scalar_select 0, %s11, %s9
  $region1: #{tpu_custom_call.1} parent=0
    #allocation3 [shape = 'u8[98304]{0}', space=vmem, size = 0x18000, scoped, tag = 'input window, operand 1, single buffered']
    #allocation4 [shape = 's32[1]{0}', space=sflag, size = 0x4, scoped, tag = 'scoped memory for tpu_custom_call.1']
    #allocation5 [shape = 's32[1]{0}', space=sflag, size = 0x4, scoped, tag = 'scoped memory for tpu_custom_call.1']
    #allocation6 [shape = 'u8[16384]{0}', space=vmem, size = 0x4000, scoped, tag = 'output window, operand 0, single buffered']
    %13 = vsyncpa [#allocation4], 0
    %14 = vsyncpa [#allocation5], 0
    // Predicated region
    $region2: #{tpu_custom_call.1} parent=1 // pred_check
      _
    $region3: #{tpu_custom_call.1} parent=1 // pred_check_branch
      %16 = sbr.rel (0) target = $region5
    $region4: #{tpu_custom_call.1} parent=1 // pred_region
      _
    $region5: #{tpu_custom_call.1} parent=1 // pred_fallthru
      _
    // Predicated region
    $region6: #{tpu_custom_call.1} parent=1 // pred_check
      _
    $region7: #{tpu_custom_call.1} parent=1 // pred_check_branch
      %18 = sbr.rel (0) target = $region9
    $region8: #{tpu_custom_call.1} parent=1 // pred_region
      %20 = vsyncadd [#allocation4], 0
      %s21 = sshll.u32 %s1, 4
      %s22 = int_to_ptr.hbm [resolvable:$true] %s21
      %s23 = sshll.u32 [#allocation3], 4
      %s24 = int_to_ptr.vmem [resolvable:$true] %s23
      %29 = dma.hbm_to_vmem [thread:$0]  %s22, 3072, %s24, [#allocation4], 128, 128, 8
    $region9: #{tpu_custom_call.1} parent=1 // pred_fallthru
      _
    // Predicated region
    $region10: #{tpu_custom_call.1} parent=1 // pred_check
      _
    $region11: #{tpu_custom_call.1} parent=1 // pred_check_branch
      %31 = sbr.rel (0) target = $region13
    $region12: #{tpu_custom_call.1} parent=1 // pred_region
      _
    $region13: #{tpu_custom_call.1} parent=1 // pred_fallthru
      _
    // Predicated region
    $region14: #{tpu_custom_call.1} parent=1 // pred_check
      _
    $region15: #{tpu_custom_call.1} parent=1 // pred_check_branch
      %33 = sbr.rel (0) target = $region17
    $region16: #{tpu_custom_call.1} parent=1 // pred_region
      _
    $region17: #{tpu_custom_call.1} parent=1 // pred_fallthru
      _
    // Predicated region
    $region18: #{tpu_custom_call.1} parent=1 // pred_check
      _
    $region19: #{tpu_custom_call.1} parent=1 // pred_check_branch
      %35 = sbr.rel (0) target = $region21
    $region20: #{tpu_custom_call.1} parent=1 // pred_region
      _
    $region21: #{tpu_custom_call.1} parent=1 // pred_fallthru
      _
    // Predicated region
    $region22: #{tpu_custom_call.1} parent=1 // pred_check
      _
    $region23: #{tpu_custom_call.1} parent=1 // pred_check_branch
      %37 = sbr.rel (0) target = $region25
    $region24: #{tpu_custom_call.1} parent=1 // pred_region
      _
    $region25: #{tpu_custom_call.1} parent=1 // pred_fallthru
      _
    // Predicated region
    $region26: #{tpu_custom_call.1} parent=1 // pred_check
      _
    $region27: #{tpu_custom_call.1} parent=1 // pred_check_branch
      %39 = sbr.rel (0) target = $region29
    $region28: #{tpu_custom_call.1} parent=1 // pred_region
      _
    $region29: #{tpu_custom_call.1} parent=1 // pred_fallthru
      _
    // Predicated region
    $region30: #{tpu_custom_call.1} parent=1 // pred_check
      _
    $region31: #{tpu_custom_call.1} parent=1 // pred_check_branch
      %41 = sbr.rel (0) target = $region33
    $region32: #{tpu_custom_call.1} parent=1 // pred_region
      _
    $region33: #{tpu_custom_call.1} parent=1 // pred_fallthru
      _
    // Predicated region
    $region34: #{tpu_custom_call.1} parent=1 // pred_check
      _
    $region35: #{tpu_custom_call.1} parent=1 // pred_check_branch
      %43 = sbr.rel (0) target = $region37
    $region36: #{tpu_custom_call.1} parent=1 // pred_region
      %45 = dma.done [#allocation4], 3072
    $region37: #{tpu_custom_call.1} parent=1 // pred_fallthru
      _
    %vm46 = vcmask 523264
    %47 = vst.msk [vmem:[#allocation2] sm:$0xff] %vm46, 0.0
    %48 = vst.msk [vmem:[#allocation2 + $0x8] sm:$0xff] %vm46, 0.0
    %vm49 = vcmask 517120
    %50 = vst.msk [vmem:[#allocation2 + $0x10] sm:$0x3] %vm49, 0.0
    %51 = vst.msk [vmem:[#allocation2 + $0x18] sm:$0xff] %vm46, 0.0
    %52 = vst.msk [vmem:[#allocation2 + $0x20] sm:$0xff] %vm46, 0.0
    %53 = vst.msk [vmem:[#allocation2 + $0x28] sm:$0x3] %vm49, 0.0
    %v54 = vld [vmem:[%s0] sm:$0xff]
    %v55 = vld [vmem:[%s0 + $0x8] sm:$0xff]
    %v56 = vld [vmem:[%s0 + $0x10] sm:$0xff]
    %v57 = vld [vmem:[%s0 + $0x18] sm:$0xff]
    %58 = vst.msk [vmem:[#allocation2 + $0x1] sm:$0xff] %vm46, %v54
    %59 = vst.msk [vmem:[#allocation2 + $0x9] sm:$0xff] %vm46, %v55
    %60 = vst.msk [vmem:[#allocation2 + $0x19] sm:$0xff] %vm46, %v56
    %61 = vst.msk [vmem:[#allocation2 + $0x21] sm:$0xff] %vm46, %v57
    %v62 = vld [vmem:[#allocation2] sm:$0xff]
    %v63 = vld [vmem:[#allocation2 + $0x8] sm:$0xff]
    %v64 = vld [vmem:[#allocation2 + $0x18] sm:$0xff]
    %v65 = vld [vmem:[#allocation2 + $0x20] sm:$0xff]
    %v66 = vld [vmem:[#allocation3] sm:$0xff]
    %v67 = vld [vmem:[#allocation3 + $0x8] sm:$0xff]
    %v68 = vld [vmem:[#allocation3 + $0x10] sm:$0xff]
    %v69 = vld [vmem:[#allocation3 + $0x18] sm:$0xff]
    %v70 = vld [vmem:[#allocation3 + $0x20] sm:$0xff]
    %v71 = vld [vmem:[#allocation3 + $0x28] sm:$0xff]
    %v72 = vld [vmem:[#allocation3 + $0x30] sm:$0xff]
    %v73 = vld [vmem:[#allocation3 + $0x38] sm:$0xff]
    %v74 = vld [vmem:[#allocation2 + $0x1] sm:$0xff]
    %v75 = vld [vmem:[#allocation2 + $0x9] sm:$0xff]
    %v76 = vld [vmem:[#allocation2 + $0x19] sm:$0xff]
    %v77 = vld [vmem:[#allocation2 + $0x21] sm:$0xff]
    %s78 = scalar_lea.vmem [#allocation3], 64
    %v79 = vld [vmem:[%s78] sm:$0xff]
    %v80 = vld [vmem:[%s78 + $0x8] sm:$0xff]
    %v81 = vld [vmem:[%s78 + $0x10] sm:$0xff]
    %v82 = vld [vmem:[%s78 + $0x18] sm:$0xff]
    %v83 = vld [vmem:[%s78 + $0x20] sm:$0xff]
    %v84 = vld [vmem:[%s78 + $0x28] sm:$0xff]
    %v85 = vld [vmem:[%s78 + $0x30] sm:$0xff]
    %v86 = vld [vmem:[%s78 + $0x38] sm:$0xff]
    %v88 = vsel %vm46, %v74, 0
    %v91 = vsel %vm46, %v75, 0
    %v94 = vsel %vm46, %v76, 0
    %v97 = vsel %vm46, %v77, 0
    %99 = vmatpush.msra.mxu0 0.0
    %100 = vmatpush.msra.mxu0 0.0
    %101 = vmatpush.msra.mxu0 0.0
    %102 = vmatpush.msra.mxu0 0.0
    %103 = vmatpush.msra.mxu0 0.0
    %104 = vmatpush.msra.mxu0 0.0
    %105 = vmatpush.msra.mxu0 0.0
    %106 = vmatpush.msra.mxu0 0.0
    %107 = vmatpush.msra.mxu0 %v86
    %108 = vmatpush.msra.mxu0 %v85
    %109 = vmatpush.msra.mxu0 %v84
    %110 = vmatpush.msra.mxu0 %v83
    %111 = vmatpush.msra.mxu0 %v82
    %112 = vmatpush.msra.mxu0 %v81
    %113 = vmatpush.msra.mxu0 %v80
    %114 = vmatpush.msra.mxu0 %v79
    %115 = vmatmul.f32.gmra.mxu0 %v88
    %v116 = vpop.f32.mrf.mxu0
    %v117 = vadd.f32 0.0, %v116
    %118 = vmatmul.f32.gmra.mxu0 %v91
    %v119 = vpop.f32.mrf.mxu0
    %v120 = vadd.f32 0.0, %v119
    %121 = vmatmul.f32.gmra.mxu0 %v94
    %v122 = vpop.f32.mrf.mxu0
    %v123 = vadd.f32 0.0, %v122
    %124 = vmatmul.f32.gmra.mxu0 %v97
    %v125 = vpop.f32.mrf.mxu0
    %v126 = vadd.f32 0.0, %v125
    %127 = vdwg.mxu0
    %v129 = vsel %vm46, %v62, 0
    %v132 = vsel %vm46, %v63, 0
    %v135 = vsel %vm46, %v64, 0
    %v138 = vsel %vm46, %v65, 0
    %140 = vmatpush.msra.mxu0 0.0
    %141 = vmatpush.msra.mxu0 0.0
    %142 = vmatpush.msra.mxu0 0.0
    %143 = vmatpush.msra.mxu0 0.0
    %144 = vmatpush.msra.mxu0 0.0
    %145 = vmatpush.msra.mxu0 0.0
    %146 = vmatpush.msra.mxu0 0.0
    %147 = vmatpush.msra.mxu0 0.0
    %148 = vmatpush.msra.mxu0 %v73
    %149 = vmatpush.msra.mxu0 %v72
    %150 = vmatpush.msra.mxu0 %v71
    %151 = vmatpush.msra.mxu0 %v70
    %152 = vmatpush.msra.mxu0 %v69
    %153 = vmatpush.msra.mxu0 %v68
    %154 = vmatpush.msra.mxu0 %v67
    %155 = vmatpush.msra.mxu0 %v66
    %156 = vmatmul.f32.gmra.mxu0 %v129
    %v157 = vpop.f32.mrf.mxu0
    %v158 = vadd.f32 %v117, %v157
    %159 = vmatmul.f32.gmra.mxu0 %v132
    %v160 = vpop.f32.mrf.mxu0
    %v161 = vadd.f32 %v120, %v160
    %162 = vmatmul.f32.gmra.mxu0 %v135
    %v163 = vpop.f32.mrf.mxu0
    %v164 = vadd.f32 %v123, %v163
    %165 = vmatmul.f32.gmra.mxu0 %v138
    %v166 = vpop.f32.mrf.mxu0
    %v167 = vadd.f32 %v126, %v166
    %168 = vdwg.mxu0
    %v169 = vld [vmem:[#allocation2 + $0x2] sm:$0xff]
    %v170 = vld [vmem:[#allocation2 + $0xa] sm:$0xff]
    %v171 = vld [vmem:[#allocation2 + $0x1a] sm:$0xff]
    %v172 = vld [vmem:[#allocation2 + $0x22] sm:$0xff]
    %s173 = scalar_lea.vmem [#allocation3], 128
    %v174 = vld [vmem:[%s173] sm:$0xff]
    %v175 = vld [vmem:[%s173 + $0x8] sm:$0xff]
    %v176 = vld [vmem:[%s173 + $0x10] sm:$0xff]
    %v177 = vld [vmem:[%s173 + $0x18] sm:$0xff]
    %v178 = vld [vmem:[%s173 + $0x20] sm:$0xff]
    %v179 = vld [vmem:[%s173 + $0x28] sm:$0xff]
    %v180 = vld [vmem:[%s173 + $0x30] sm:$0xff]
    %v181 = vld [vmem:[%s173 + $0x38] sm:$0xff]
    %v183 = vsel %vm46, %v169, 0
    %v186 = vsel %vm46, %v170, 0
    %v189 = vsel %vm46, %v171, 0
    %v192 = vsel %vm46, %v172, 0
    %194 = vmatpush.msra.mxu0 0.0
    %195 = vmatpush.msra.mxu0 0.0
    %196 = vmatpush.msra.mxu0 0.0
    %197 = vmatpush.msra.mxu0 0.0
    %198 = vmatpush.msra.mxu0 0.0
    %199 = vmatpush.msra.mxu0 0.0
    %200 = vmatpush.msra.mxu0 0.0
    %201 = vmatpush.msra.mxu0 0.0
    %202 = vmatpush.msra.mxu0 %v181
    %203 = vmatpush.msra.mxu0 %v180
    %204 = vmatpush.msra.mxu0 %v179
    %205 = vmatpush.msra.mxu0 %v178
    %206 = vmatpush.msra.mxu0 %v177
    %207 = vmatpush.msra.mxu0 %v176
    %208 = vmatpush.msra.mxu0 %v175
    %209 = vmatpush.msra.mxu0 %v174
    %210 = vmatmul.f32.gmra.mxu0 %v183
    %v211 = vpop.f32.mrf.mxu0
    %v212 = vadd.f32 0.0, %v211
    %213 = vmatmul.f32.gmra.mxu0 %v186
    %v214 = vpop.f32.mrf.mxu0
    %v215 = vadd.f32 0.0, %v214
    %216 = vmatmul.f32.gmra.mxu0 %v189
    %v217 = vpop.f32.mrf.mxu0
    %v218 = vadd.f32 0.0, %v217
    %219 = vmatmul.f32.gmra.mxu0 %v192
    %v220 = vpop.f32.mrf.mxu0
    %v221 = vadd.f32 0.0, %v220
    %222 = vdwg.mxu0
    %v223 = vadd.f32 %v158, %v212
    %v224 = vadd.f32 %v161, %v215
    %v225 = vadd.f32 %v164, %v218
    %v226 = vadd.f32 %v167, %v221
    %v227 = vld [vmem:[%s2] sm:$0x1]
    %v229 = vperm.slane %v227, 0
    %v231 = vadd.f32 %v223, %v229
    %v232 = vadd.f32 %v224, %v229
    %v233 = vadd.f32 %v225, %v229
    %v234 = vadd.f32 %v226, %v229
    %v235 = vmax.f32 %v231, 0.0
    %v236 = vmax.f32 %v232, 0.0
    %v237 = vmax.f32 %v233, 0.0
    %v238 = vmax.f32 %v234, 0.0
    %v239 = vld [vmem:[%s5] sm:$0x1]
    %vm240 = vcmask 261120
    %v242 = vsel %vm240, %v239, 0
    %244 = vmatpush.msra.mxu0 0.0
    %245 = vmatpush.msra.mxu0 0.0
    %246 = vmatpush.msra.mxu0 0.0
    %247 = vmatpush.msra.mxu0 0.0
    %248 = vmatpush.msra.mxu0 0.0
    %249 = vmatpush.msra.mxu0 0.0
    %250 = vmatpush.msra.mxu0 0.0
    %251 = vmatpush.msra.mxu0 0.0
    %252 = vmatpush.msra.mxu0 0.0
    %253 = vmatpush.msra.mxu0 0.0
    %254 = vmatpush.msra.mxu0 0.0
    %255 = vmatpush.msra.mxu0 0.0
    %256 = vmatpush.msra.mxu0 %v238
    %257 = vmatpush.msra.mxu0 %v237
    %258 = vmatpush.msra.mxu0 %v236
    %259 = vmatpush.msra.mxu0 %v235
    %260 = vmatmul.f32.gmra.mxu0 %v242
    %v261 = vpop.f32.mrf.mxu0
    %v262 = vadd.f32 0.0, %v261
    %263 = vdwg.mxu0
    %v264 = vld [vmem:[%s6] sm:$0xff]
    %v265 = vld [vmem:[%s6 + $0x8] sm:$0xff]
    %v266 = vld [vmem:[%s6 + $0x10] sm:$0xff]
    %v267 = vld [vmem:[%s6 + $0x18] sm:$0xff]
    %v268 = vld [vmem:[%s6 + $0x20] sm:$0xff]
    %v269 = vld [vmem:[%s6 + $0x28] sm:$0xff]
    %v270 = vld [vmem:[%s6 + $0x30] sm:$0xff]
    %v271 = vld [vmem:[%s6 + $0x38] sm:$0xff]
    %v273 = vsel %vm46, %v262, 0
    %275 = vmatpush.msra.mxu0 0.0
    %276 = vmatpush.msra.mxu0 0.0
    %277 = vmatpush.msra.mxu0 0.0
    %278 = vmatpush.msra.mxu0 0.0
    %279 = vmatpush.msra.mxu0 0.0
    %280 = vmatpush.msra.mxu0 0.0
    %281 = vmatpush.msra.mxu0 0.0
    %282 = vmatpush.msra.mxu0 0.0
    %283 = vmatpush.msra.mxu0 %v271
    %284 = vmatpush.msra.mxu0 %v270
    %285 = vmatpush.msra.mxu0 %v269
    %286 = vmatpush.msra.mxu0 %v268
    %287 = vmatpush.msra.mxu0 %v267
    %288 = vmatpush.msra.mxu0 %v266
    %289 = vmatpush.msra.mxu0 %v265
    %290 = vmatpush.msra.mxu0 %v264
    %291 = vmatmul.f32.gmra.mxu0 %v273
    %v292 = vpop.f32.mrf.mxu0
    %v293 = vadd.f32 0.0, %v292
    %294 = vdwg.mxu0
    %v295 = vmul.f32 %v235, %v235
    %v296 = vmul.f32 %v236, %v236
    %v297 = vmul.f32 %v237, %v237
    %v298 = vmul.f32 %v238, %v238
    %299 = vmatpush.msra.mxu0 0.0
    %300 = vmatpush.msra.mxu0 0.0
    %301 = vmatpush.msra.mxu0 0.0
    %302 = vmatpush.msra.mxu0 0.0
    %303 = vmatpush.msra.mxu0 0.0
    %304 = vmatpush.msra.mxu0 0.0
    %305 = vmatpush.msra.mxu0 0.0
    %306 = vmatpush.msra.mxu0 0.0
    %307 = vmatpush.msra.mxu0 0.0
    %308 = vmatpush.msra.mxu0 0.0
    %309 = vmatpush.msra.mxu0 0.0
    %310 = vmatpush.msra.mxu0 0.0
    %311 = vmatpush.msra.mxu0 %v298
    %312 = vmatpush.msra.mxu0 %v297
    %313 = vmatpush.msra.mxu0 %v296
    %314 = vmatpush.msra.mxu0 %v295
    %315 = vmatmul.f32.gmra.mxu0 %v242
    %v316 = vpop.f32.mrf.mxu0
    %v317 = vadd.f32 0.0, %v316
    %318 = vdwg.mxu0
    %v320 = vsel %vm46, %v317, 0
    %322 = vmatpush.msra.mxu0 0.0
    %323 = vmatpush.msra.mxu0 0.0
    %324 = vmatpush.msra.mxu0 0.0
    %325 = vmatpush.msra.mxu0 0.0
    %326 = vmatpush.msra.mxu0 0.0
    %327 = vmatpush.msra.mxu0 0.0
    %328 = vmatpush.msra.mxu0 0.0
    %329 = vmatpush.msra.mxu0 0.0
    %330 = vmatpush.msra.mxu0 %v271
    %331 = vmatpush.msra.mxu0 %v270
    %332 = vmatpush.msra.mxu0 %v269
    %333 = vmatpush.msra.mxu0 %v268
    %334 = vmatpush.msra.mxu0 %v267
    %335 = vmatpush.msra.mxu0 %v266
    %336 = vmatpush.msra.mxu0 %v265
    %337 = vmatpush.msra.mxu0 %v264
    %338 = vmatmul.f32.gmra.mxu0 %v320
    %v339 = vpop.f32.mrf.mxu0
    %v340 = vadd.f32 0.0, %v339
    %341 = vdwg.mxu0
    %v342 = vmul.f32 %v293, 0.001953125
    %v343 = vmul.f32 %v340, 0.001953125
    %v344 = vmul.f32 %v342, %v342
    %v345 = vsub.f32 %v343, %v344
    %v346 = vmax.f32 %v345, 0.0
    %v347 = vld [vmem:[%s3] sm:$0x1]
    %v348 = vadd.f32 %v346, 4.0
    %v349 = vrsqrt.pop %v348
    %v350 = vmul.f32 %v349, %v348
    %v351 = vmul.f32 %v350, %v349
    %v352 = vmul.f32 0.5, %v351
    %v353 = vsub.f32 1.5, %v352
    %v354 = vmul.f32 %v349, %v353
    %vm355 = vweird.f32 %v348
    %vm356 = vweird.f32 %v349
    %vm357 = vmor %vm355, %vm356
    %v358 = vsel %vm357, %v349, %v354
    %v359 = vmul.f32 %v347, %v358
    %v360 = vld [vmem:[%s4] sm:$0x1]
    %v361 = vmul.f32 %v342, %v359
    %v362 = vsub.f32 %v360, %v361
    %v364 = vrot.slane %v362, 7
    %vm366 = vcmask 1040384
    %v367 = vsel %vm366, %v359, %v364
    %v368 = vld [vmem:[%s7] sm:$0xf]
    %vm369 = vcmask 31744
    %v371 = vsel %vm369, %v367, 0
    %vm373 = vcmask 1043456
    %v375 = vsel %vm373, %v368, 0
    %377 = vmatpush.msra.mxu0 0.0
    %378 = vmatpush.msra.mxu0 0.0
    %379 = vmatpush.msra.mxu0 0.0
    %380 = vmatpush.msra.mxu0 0.0
    %381 = vmatpush.msra.mxu0 0.0
    %382 = vmatpush.msra.mxu0 0.0
    %383 = vmatpush.msra.mxu0 0.0
    %384 = vmatpush.msra.mxu0 0.0
    %385 = vmatpush.msra.mxu0 0.0
    %386 = vmatpush.msra.mxu0 0.0
    %387 = vmatpush.msra.mxu0 0.0
    %388 = vmatpush.msra.mxu0 0.0
    %389 = vmatpush.msra.mxu0 0.0
    %390 = vmatpush.msra.mxu0 0.0
    %391 = vmatpush.msra.mxu0 0.0
    %392 = vmatpush.msra.mxu0 %v375
    %393 = vmatmul.f32.gmra.mxu0 %v371
    %v394 = vpop.f32.mrf.mxu0
    %v395 = vadd.f32 0.0, %v394
    %396 = vdwg.mxu0
    %v397 = vperm.slane %v395, 0
    %v398 = vmul.f32 %v235, %v397
    %v399 = vmul.f32 %v236, %v397
    %v400 = vmul.f32 %v237, %v397
    %v401 = vmul.f32 %v238, %v397
    %v402 = vperm.slane %v395, 1
    %v403 = vadd.f32 %v398, %v402
    %v404 = vadd.f32 %v399, %v402
    %v405 = vadd.f32 %v400, %v402
    %v406 = vadd.f32 %v401, %v402
    %407 = vst.msk [vmem:[#allocation2 + $0x1] sm:$0xff] %vm46, %v403
    %408 = vst.msk [vmem:[#allocation2 + $0x9] sm:$0xff] %vm46, %v404
    %409 = vst.msk [vmem:[#allocation2 + $0x19] sm:$0xff] %vm46, %v405
    %410 = vst.msk [vmem:[#allocation2 + $0x21] sm:$0xff] %vm46, %v406
    %v411 = vld [vmem:[#allocation2] sm:$0xff]
    %v412 = vld [vmem:[#allocation2 + $0x8] sm:$0xff]
    %v413 = vld [vmem:[#allocation2 + $0x18] sm:$0xff]
    %v414 = vld [vmem:[#allocation2 + $0x20] sm:$0xff]
    %v415 = vld [vmem:[#allocation3] sm:$0xff]
    %v416 = vld [vmem:[#allocation3 + $0x8] sm:$0xff]
    %v417 = vld [vmem:[#allocation3 + $0x10] sm:$0xff]
    %v418 = vld [vmem:[#allocation3 + $0x18] sm:$0xff]
    %v419 = vld [vmem:[#allocation3 + $0x20] sm:$0xff]
    %v420 = vld [vmem:[#allocation3 + $0x28] sm:$0xff]
    %v421 = vld [vmem:[#allocation3 + $0x30] sm:$0xff]
    %v422 = vld [vmem:[#allocation3 + $0x38] sm:$0xff]
    %v423 = vld [vmem:[#allocation2 + $0x1] sm:$0xff]
    %v424 = vld [vmem:[#allocation2 + $0x9] sm:$0xff]
    %v425 = vld [vmem:[#allocation2 + $0x19] sm:$0xff]
    %v426 = vld [vmem:[#allocation2 + $0x21] sm:$0xff]
    %v427 = vld [vmem:[%s78] sm:$0xff]
    %v428 = vld [vmem:[%s78 + $0x8] sm:$0xff]
    %v429 = vld [vmem:[%s78 + $0x10] sm:$0xff]
    %v430 = vld [vmem:[%s78 + $0x18] sm:$0xff]
    %v431 = vld [vmem:[%s78 + $0x20] sm:$0xff]
    %v432 = vld [vmem:[%s78 + $0x28] sm:$0xff]
    %v433 = vld [vmem:[%s78 + $0x30] sm:$0xff]
    %v434 = vld [vmem:[%s78 + $0x38] sm:$0xff]
    %v436 = vsel %vm46, %v423, 0
    %v439 = vsel %vm46, %v424, 0
    %v442 = vsel %vm46, %v425, 0
    %v445 = vsel %vm46, %v426, 0
    %447 = vmatpush.msra.mxu0 0.0
    %448 = vmatpush.msra.mxu0 0.0
    %449 = vmatpush.msra.mxu0 0.0
    %450 = vmatpush.msra.mxu0 0.0
    %451 = vmatpush.msra.mxu0 0.0
    %452 = vmatpush.msra.mxu0 0.0
    %453 = vmatpush.msra.mxu0 0.0
    %454 = vmatpush.msra.mxu0 0.0
    %455 = vmatpush.msra.mxu0 %v434
    %456 = vmatpush.msra.mxu0 %v433
    %457 = vmatpush.msra.mxu0 %v432
    %458 = vmatpush.msra.mxu0 %v431
    %459 = vmatpush.msra.mxu0 %v430
    %460 = vmatpush.msra.mxu0 %v429
    %461 = vmatpush.msra.mxu0 %v428
    %462 = vmatpush.msra.mxu0 %v427
    %463 = vmatmul.f32.gmra.mxu0 %v436
    %v464 = vpop.f32.mrf.mxu0
    %v465 = vadd.f32 0.0, %v464
    %466 = vmatmul.f32.gmra.mxu0 %v439
    %v467 = vpop.f32.mrf.mxu0
    %v468 = vadd.f32 0.0, %v467
    %469 = vmatmul.f32.gmra.mxu0 %v442
    %v470 = vpop.f32.mrf.mxu0
    %v471 = vadd.f32 0.0, %v470
    %472 = vmatmul.f32.gmra.mxu0 %v445
    %v473 = vpop.f32.mrf.mxu0
    %v474 = vadd.f32 0.0, %v473
    %475 = vdwg.mxu0
    %v477 = vsel %vm46, %v411, 0
    %v480 = vsel %vm46, %v412, 0
    %v483 = vsel %vm46, %v413, 0
    %v486 = vsel %vm46, %v414, 0
    %488 = vmatpush.msra.mxu0 0.0
    %489 = vmatpush.msra.mxu0 0.0
    %490 = vmatpush.msra.mxu0 0.0
    %491 = vmatpush.msra.mxu0 0.0
    %492 = vmatpush.msra.mxu0 0.0
    %493 = vmatpush.msra.mxu0 0.0
    %494 = vmatpush.msra.mxu0 0.0
    %495 = vmatpush.msra.mxu0 0.0
    %496 = vmatpush.msra.mxu0 %v422
    %497 = vmatpush.msra.mxu0 %v421
    %498 = vmatpush.msra.mxu0 %v420
    %499 = vmatpush.msra.mxu0 %v419
    %500 = vmatpush.msra.mxu0 %v418
    %501 = vmatpush.msra.mxu0 %v417
    %502 = vmatpush.msra.mxu0 %v416
    %503 = vmatpush.msra.mxu0 %v415
    %504 = vmatmul.f32.gmra.mxu0 %v477
    %v505 = vpop.f32.mrf.mxu0
    %v506 = vadd.f32 %v465, %v505
    %507 = vmatmul.f32.gmra.mxu0 %v480
    %v508 = vpop.f32.mrf.mxu0
    %v509 = vadd.f32 %v468, %v508
    %510 = vmatmul.f32.gmra.mxu0 %v483
    %v511 = vpop.f32.mrf.mxu0
    %v512 = vadd.f32 %v471, %v511
    %513 = vmatmul.f32.gmra.mxu0 %v486
    %v514 = vpop.f32.mrf.mxu0
    %v515 = vadd.f32 %v474, %v514
    %516 = vdwg.mxu0
    %v517 = vld [vmem:[#allocation2 + $0x2] sm:$0xff]
    %v518 = vld [vmem:[#allocation2 + $0xa] sm:$0xff]
    %v519 = vld [vmem:[#allocation2 + $0x1a] sm:$0xff]
    %v520 = vld [vmem:[#allocation2 + $0x22] sm:$0xff]
    %v521 = vld [vmem:[%s173] sm:$0xff]
    %v522 = vld [vmem:[%s173 + $0x8] sm:$0xff]
    %v523 = vld [vmem:[%s173 + $0x10] sm:$0xff]
    %v524 = vld [vmem:[%s173 + $0x18] sm:$0xff]
    %v525 = vld [vmem:[%s173 + $0x20] sm:$0xff]
    %v526 = vld [vmem:[%s173 + $0x28] sm:$0xff]
    %v527 = vld [vmem:[%s173 + $0x30] sm:$0xff]
    %v528 = vld [vmem:[%s173 + $0x38] sm:$0xff]
    %v530 = vsel %vm46, %v517, 0
    %v533 = vsel %vm46, %v518, 0
    %v536 = vsel %vm46, %v519, 0
    %v539 = vsel %vm46, %v520, 0
    %541 = vmatpush.msra.mxu0 0.0
    %542 = vmatpush.msra.mxu0 0.0
    %543 = vmatpush.msra.mxu0 0.0
    %544 = vmatpush.msra.mxu0 0.0
    %545 = vmatpush.msra.mxu0 0.0
    %546 = vmatpush.msra.mxu0 0.0
    %547 = vmatpush.msra.mxu0 0.0
    %548 = vmatpush.msra.mxu0 0.0
    %549 = vmatpush.msra.mxu0 %v528
    %550 = vmatpush.msra.mxu0 %v527
    %551 = vmatpush.msra.mxu0 %v526
    %552 = vmatpush.msra.mxu0 %v525
    %553 = vmatpush.msra.mxu0 %v524
    %554 = vmatpush.msra.mxu0 %v523
    %555 = vmatpush.msra.mxu0 %v522
    %556 = vmatpush.msra.mxu0 %v521
    %557 = vmatmul.f32.gmra.mxu0 %v530
    %v558 = vpop.f32.mrf.mxu0
    %v559 = vadd.f32 0.0, %v558
    %560 = vmatmul.f32.gmra.mxu0 %v533
    %v561 = vpop.f32.mrf.mxu0
    %v562 = vadd.f32 0.0, %v561
    %563 = vmatmul.f32.gmra.mxu0 %v536
    %v564 = vpop.f32.mrf.mxu0
    %v565 = vadd.f32 0.0, %v564
    %566 = vmatmul.f32.gmra.mxu0 %v539
    %v567 = vpop.f32.mrf.mxu0
    %v568 = vadd.f32 0.0, %v567
    %569 = vdwg.mxu0
    %v570 = vadd.f32 %v506, %v559
    %v571 = vadd.f32 %v509, %v562
    %v572 = vadd.f32 %v512, %v565
    %v573 = vadd.f32 %v515, %v568
    %v574 = vld [vmem:[%s2] sm:$0x1]
    %v576 = vperm.slane %v574, 0
    %v578 = vadd.f32 %v570, %v576
    %v579 = vadd.f32 %v571, %v576
    %v580 = vadd.f32 %v572, %v576
    %v581 = vadd.f32 %v573, %v576
    %v582 = vmax.f32 %v578, 0.0
    %v583 = vmax.f32 %v579, 0.0
    %v584 = vmax.f32 %v580, 0.0
    %v585 = vmax.f32 %v581, 0.0
    %v586 = vld [vmem:[%s5] sm:$0x1]
    %v588 = vsel %vm240, %v586, 0
    %590 = vmatpush.msra.mxu0 0.0
    %591 = vmatpush.msra.mxu0 0.0
    %592 = vmatpush.msra.mxu0 0.0
    %593 = vmatpush.msra.mxu0 0.0
    %594 = vmatpush.msra.mxu0 0.0
    %595 = vmatpush.msra.mxu0 0.0
    %596 = vmatpush.msra.mxu0 0.0
    %597 = vmatpush.msra.mxu0 0.0
    %598 = vmatpush.msra.mxu0 0.0
    %599 = vmatpush.msra.mxu0 0.0
    %600 = vmatpush.msra.mxu0 0.0
    %601 = vmatpush.msra.mxu0 0.0
    %602 = vmatpush.msra.mxu0 %v585
    %603 = vmatpush.msra.mxu0 %v584
    %604 = vmatpush.msra.mxu0 %v583
    %605 = vmatpush.msra.mxu0 %v582
    %606 = vmatmul.f32.gmra.mxu0 %v588
    %v607 = vpop.f32.mrf.mxu0
    %v608 = vadd.f32 0.0, %v607
    %609 = vdwg.mxu0
    %v610 = vld [vmem:[%s6] sm:$0xff]
    %v611 = vld [vmem:[%s6 + $0x8] sm:$0xff]
    %v612 = vld [vmem:[%s6 + $0x10] sm:$0xff]
    %v613 = vld [vmem:[%s6 + $0x18] sm:$0xff]
    %v614 = vld [vmem:[%s6 + $0x20] sm:$0xff]
    %v615 = vld [vmem:[%s6 + $0x28] sm:$0xff]
    %v616 = vld [vmem:[%s6 + $0x30] sm:$0xff]
    %v617 = vld [vmem:[%s6 + $0x38] sm:$0xff]
    %v619 = vsel %vm46, %v608, 0
    %621 = vmatpush.msra.mxu0 0.0
    %622 = vmatpush.msra.mxu0 0.0
    %623 = vmatpush.msra.mxu0 0.0
    %624 = vmatpush.msra.mxu0 0.0
    %625 = vmatpush.msra.mxu0 0.0
    %626 = vmatpush.msra.mxu0 0.0
    %627 = vmatpush.msra.mxu0 0.0
    %628 = vmatpush.msra.mxu0 0.0
    %629 = vmatpush.msra.mxu0 %v617
    %630 = vmatpush.msra.mxu0 %v616
    %631 = vmatpush.msra.mxu0 %v615
    %632 = vmatpush.msra.mxu0 %v614
    %633 = vmatpush.msra.mxu0 %v613
    %634 = vmatpush.msra.mxu0 %v612
    %635 = vmatpush.msra.mxu0 %v611
    %636 = vmatpush.msra.mxu0 %v610
    %637 = vmatmul.f32.gmra.mxu0 %v619
    %v638 = vpop.f32.mrf.mxu0
    %v639 = vadd.f32 0.0, %v638
    %640 = vdwg.mxu0
    %v641 = vmul.f32 %v582, %v582
    %v642 = vmul.f32 %v583, %v583
    %v643 = vmul.f32 %v584, %v584
    %v644 = vmul.f32 %v585, %v585
    %645 = vmatpush.msra.mxu0 0.0
    %646 = vmatpush.msra.mxu0 0.0
    %647 = vmatpush.msra.mxu0 0.0
    %648 = vmatpush.msra.mxu0 0.0
    %649 = vmatpush.msra.mxu0 0.0
    %650 = vmatpush.msra.mxu0 0.0
    %651 = vmatpush.msra.mxu0 0.0
    %652 = vmatpush.msra.mxu0 0.0
    %653 = vmatpush.msra.mxu0 0.0
    %654 = vmatpush.msra.mxu0 0.0
    %655 = vmatpush.msra.mxu0 0.0
    %656 = vmatpush.msra.mxu0 0.0
    %657 = vmatpush.msra.mxu0 %v644
    %658 = vmatpush.msra.mxu0 %v643
    %659 = vmatpush.msra.mxu0 %v642
    %660 = vmatpush.msra.mxu0 %v641
    %661 = vmatmul.f32.gmra.mxu0 %v588
    %v662 = vpop.f32.mrf.mxu0
    %v663 = vadd.f32 0.0, %v662
    %664 = vdwg.mxu0
    %v666 = vsel %vm46, %v663, 0
    %668 = vmatpush.msra.mxu0 0.0
    %669 = vmatpush.msra.mxu0 0.0
    %670 = vmatpush.msra.mxu0 0.0
    %671 = vmatpush.msra.mxu0 0.0
    %672 = vmatpush.msra.mxu0 0.0
    %673 = vmatpush.msra.mxu0 0.0
    %674 = vmatpush.msra.mxu0 0.0
    %675 = vmatpush.msra.mxu0 0.0
    %676 = vmatpush.msra.mxu0 %v617
    %677 = vmatpush.msra.mxu0 %v616
    %678 = vmatpush.msra.mxu0 %v615
    %679 = vmatpush.msra.mxu0 %v614
    %680 = vmatpush.msra.mxu0 %v613
    %681 = vmatpush.msra.mxu0 %v612
    %682 = vmatpush.msra.mxu0 %v611
    %683 = vmatpush.msra.mxu0 %v610
    %684 = vmatmul.f32.gmra.mxu0 %v666
    %v685 = vpop.f32.mrf.mxu0
    %v686 = vadd.f32 0.0, %v685
    %687 = vdwg.mxu0
    %v688 = vmul.f32 %v639, 0.001953125
    %v689 = vmul.f32 %v686, 0.001953125
    %v690 = vmul.f32 %v688, %v688
    %v691 = vsub.f32 %v689, %v690
    %v692 = vmax.f32 %v691, 0.0
    %v693 = vld [vmem:[%s3 + $0x1] sm:$0x1]
    %v694 = vadd.f32 %v692, 4.0
    %v695 = vrsqrt.pop %v694
    %v696 = vmul.f32 %v695, %v694
    %v697 = vmul.f32 %v696, %v695
    %v698 = vmul.f32 0.5, %v697
    %v699 = vsub.f32 1.5, %v698
    %v700 = vmul.f32 %v695, %v699
    %vm701 = vweird.f32 %v694
    %vm702 = vweird.f32 %v695
    %vm703 = vmor %vm701, %vm702
    %v704 = vsel %vm703, %v695, %v700
    %v705 = vmul.f32 %v693, %v704
    %v706 = vld [vmem:[%s4 + $0x1] sm:$0x1]
    %v707 = vmul.f32 %v688, %v705
    %v708 = vsub.f32 %v706, %v707
    %v710 = vrot.slane %v708, 7
    %v712 = vsel %vm366, %v705, %v710
    %v713 = vld [vmem:[%s7] sm:$0xf]
    %v715 = vsel %vm369, %v712, 0
    %v718 = vsel %vm373, %v713, 0
    %720 = vmatpush.msra.mxu0 0.0
    %721 = vmatpush.msra.mxu0 0.0
    %722 = vmatpush.msra.mxu0 0.0
    %723 = vmatpush.msra.mxu0 0.0
    %724 = vmatpush.msra.mxu0 0.0
    %725 = vmatpush.msra.mxu0 0.0
    %726 = vmatpush.msra.mxu0 0.0
    %727 = vmatpush.msra.mxu0 0.0
    %728 = vmatpush.msra.mxu0 0.0
    %729 = vmatpush.msra.mxu0 0.0
    %730 = vmatpush.msra.mxu0 0.0
    %731 = vmatpush.msra.mxu0 0.0
    %732 = vmatpush.msra.mxu0 0.0
    %733 = vmatpush.msra.mxu0 0.0
    %734 = vmatpush.msra.mxu0 0.0
    %735 = vmatpush.msra.mxu0 %v718
    %736 = vmatmul.f32.gmra.mxu0 %v715
    %v737 = vpop.f32.mrf.mxu0
    %v738 = vadd.f32 0.0, %v737
    %739 = vdwg.mxu0
    %v740 = vperm.slane %v738, 0
    %v741 = vmul.f32 %v582, %v740
    %v742 = vmul.f32 %v583, %v740
    %v743 = vmul.f32 %v584, %v740
    %v744 = vmul.f32 %v585, %v740
    %v745 = vperm.slane %v738, 1
    %v746 = vadd.f32 %v741, %v745
    %v747 = vadd.f32 %v742, %v745
    %v748 = vadd.f32 %v743, %v745
    %v749 = vadd.f32 %v744, %v745
    %750 = vst.msk [vmem:[#allocation2 + $0x1] sm:$0xff] %vm46, %v746
    %751 = vst.msk [vmem:[#allocation2 + $0x9] sm:$0xff] %vm46, %v747
    %752 = vst.msk [vmem:[#allocation2 + $0x19] sm:$0xff] %vm46, %v748
    %753 = vst.msk [vmem:[#allocation2 + $0x21] sm:$0xff] %vm46, %v749
    %v754 = vld [vmem:[#allocation2] sm:$0xff]
    %v755 = vld [vmem:[#allocation2 + $0x8] sm:$0xff]
    %v756 = vld [vmem:[#allocation2 + $0x18] sm:$0xff]
    %v757 = vld [vmem:[#allocation2 + $0x20] sm:$0xff]
    %v758 = vld [vmem:[#allocation3] sm:$0xff]
    %v759 = vld [vmem:[#allocation3 + $0x8] sm:$0xff]
    %v760 = vld [vmem:[#allocation3 + $0x10] sm:$0xff]
    %v761 = vld [vmem:[#allocation3 + $0x18] sm:$0xff]
    %v762 = vld [vmem:[#allocation3 + $0x20] sm:$0xff]
    %v763 = vld [vmem:[#allocation3 + $0x28] sm:$0xff]
    %v764 = vld [vmem:[#allocation3 + $0x30] sm:$0xff]
    %v765 = vld [vmem:[#allocation3 + $0x38] sm:$0xff]
    %v766 = vld [vmem:[#allocation2 + $0x1] sm:$0xff]
    %v767 = vld [vmem:[#allocation2 + $0x9] sm:$0xff]
    %v768 = vld [vmem:[#allocation2 + $0x19] sm:$0xff]
    %v769 = vld [vmem:[#allocation2 + $0x21] sm:$0xff]
    %v770 = vld [vmem:[%s78] sm:$0xff]
    %v771 = vld [vmem:[%s78 + $0x8] sm:$0xff]
    %v772 = vld [vmem:[%s78 + $0x10] sm:$0xff]
    %v773 = vld [vmem:[%s78 + $0x18] sm:$0xff]
    %v774 = vld [vmem:[%s78 + $0x20] sm:$0xff]
    %v775 = vld [vmem:[%s78 + $0x28] sm:$0xff]
    %v776 = vld [vmem:[%s78 + $0x30] sm:$0xff]
    %v777 = vld [vmem:[%s78 + $0x38] sm:$0xff]
    %v779 = vsel %vm46, %v766, 0
    %v782 = vsel %vm46, %v767, 0
    %v785 = vsel %vm46, %v768, 0
    %v788 = vsel %vm46, %v769, 0
    %790 = vmatpush.msra.mxu0 0.0
    %791 = vmatpush.msra.mxu0 0.0
    %792 = vmatpush.msra.mxu0 0.0
    %793 = vmatpush.msra.mxu0 0.0
    %794 = vmatpush.msra.mxu0 0.0
    %795 = vmatpush.msra.mxu0 0.0
    %796 = vmatpush.msra.mxu0 0.0
    %797 = vmatpush.msra.mxu0 0.0
    %798 = vmatpush.msra.mxu0 %v777
    %799 = vmatpush.msra.mxu0 %v776
    %800 = vmatpush.msra.mxu0 %v775
    %801 = vmatpush.msra.mxu0 %v774
    %802 = vmatpush.msra.mxu0 %v773
    %803 = vmatpush.msra.mxu0 %v772
    %804 = vmatpush.msra.mxu0 %v771
    %805 = vmatpush.msra.mxu0 %v770
    %806 = vmatmul.f32.gmra.mxu0 %v779
    %v807 = vpop.f32.mrf.mxu0
    %v808 = vadd.f32 0.0, %v807
    %809 = vmatmul.f32.gmra.mxu0 %v782
    %v810 = vpop.f32.mrf.mxu0
    %v811 = vadd.f32 0.0, %v810
    %812 = vmatmul.f32.gmra.mxu0 %v785
    %v813 = vpop.f32.mrf.mxu0
    %v814 = vadd.f32 0.0, %v813
    %815 = vmatmul.f32.gmra.mxu0 %v788
    %v816 = vpop.f32.mrf.mxu0
    %v817 = vadd.f32 0.0, %v816
    %818 = vdwg.mxu0
    %v820 = vsel %vm46, %v754, 0
    %v823 = vsel %vm46, %v755, 0
    %v826 = vsel %vm46, %v756, 0
    %v829 = vsel %vm46, %v757, 0
    %831 = vmatpush.msra.mxu0 0.0
    %832 = vmatpush.msra.mxu0 0.0
    %833 = vmatpush.msra.mxu0 0.0
    %834 = vmatpush.msra.mxu0 0.0
    %835 = vmatpush.msra.mxu0 0.0
    %836 = vmatpush.msra.mxu0 0.0
    %837 = vmatpush.msra.mxu0 0.0
    %838 = vmatpush.msra.mxu0 0.0
    %839 = vmatpush.msra.mxu0 %v765
    %840 = vmatpush.msra.mxu0 %v764
    %841 = vmatpush.msra.mxu0 %v763
    %842 = vmatpush.msra.mxu0 %v762
    %843 = vmatpush.msra.mxu0 %v761
    %844 = vmatpush.msra.mxu0 %v760
    %845 = vmatpush.msra.mxu0 %v759
    %846 = vmatpush.msra.mxu0 %v758
    %847 = vmatmul.f32.gmra.mxu0 %v820
    %v848 = vpop.f32.mrf.mxu0
    %v849 = vadd.f32 %v808, %v848
    %850 = vmatmul.f32.gmra.mxu0 %v823
    %v851 = vpop.f32.mrf.mxu0
    %v852 = vadd.f32 %v811, %v851
    %853 = vmatmul.f32.gmra.mxu0 %v826
    %v854 = vpop.f32.mrf.mxu0
    %v855 = vadd.f32 %v814, %v854
    %856 = vmatmul.f32.gmra.mxu0 %v829
    %v857 = vpop.f32.mrf.mxu0
    %v858 = vadd.f32 %v817, %v857
    %859 = vdwg.mxu0
    %v860 = vld [vmem:[#allocation2 + $0x2] sm:$0xff]
    %v861 = vld [vmem:[#allocation2 + $0xa] sm:$0xff]
    %v862 = vld [vmem:[#allocation2 + $0x1a] sm:$0xff]
    %v863 = vld [vmem:[#allocation2 + $0x22] sm:$0xff]
    %v864 = vld [vmem:[%s173] sm:$0xff]
    %v865 = vld [vmem:[%s173 + $0x8] sm:$0xff]
    %v866 = vld [vmem:[%s173 + $0x10] sm:$0xff]
    %v867 = vld [vmem:[%s173 + $0x18] sm:$0xff]
    %v868 = vld [vmem:[%s173 + $0x20] sm:$0xff]
    %v869 = vld [vmem:[%s173 + $0x28] sm:$0xff]
    %v870 = vld [vmem:[%s173 + $0x30] sm:$0xff]
    %v871 = vld [vmem:[%s173 + $0x38] sm:$0xff]
    %v873 = vsel %vm46, %v860, 0
    %v876 = vsel %vm46, %v861, 0
    %v879 = vsel %vm46, %v862, 0
    %v882 = vsel %vm46, %v863, 0
    %884 = vmatpush.msra.mxu0 0.0
    %885 = vmatpush.msra.mxu0 0.0
    %886 = vmatpush.msra.mxu0 0.0
    %887 = vmatpush.msra.mxu0 0.0
    %888 = vmatpush.msra.mxu0 0.0
    %889 = vmatpush.msra.mxu0 0.0
    %890 = vmatpush.msra.mxu0 0.0
    %891 = vmatpush.msra.mxu0 0.0
    %892 = vmatpush.msra.mxu0 %v871
    %893 = vmatpush.msra.mxu0 %v870
    %894 = vmatpush.msra.mxu0 %v869
    %895 = vmatpush.msra.mxu0 %v868
    %896 = vmatpush.msra.mxu0 %v867
    %897 = vmatpush.msra.mxu0 %v866
    %898 = vmatpush.msra.mxu0 %v865
    %899 = vmatpush.msra.mxu0 %v864
    %900 = vmatmul.f32.gmra.mxu0 %v873
    %v901 = vpop.f32.mrf.mxu0
    %v902 = vadd.f32 0.0, %v901
    %903 = vmatmul.f32.gmra.mxu0 %v876
    %v904 = vpop.f32.mrf.mxu0
    %v905 = vadd.f32 0.0, %v904
    %906 = vmatmul.f32.gmra.mxu0 %v879
    %v907 = vpop.f32.mrf.mxu0
    %v908 = vadd.f32 0.0, %v907
    %909 = vmatmul.f32.gmra.mxu0 %v882
    %v910 = vpop.f32.mrf.mxu0
    %v911 = vadd.f32 0.0, %v910
    %912 = vdwg.mxu0
    %v913 = vadd.f32 %v849, %v902
    %v914 = vadd.f32 %v852, %v905
    %v915 = vadd.f32 %v855, %v908
    %v916 = vadd.f32 %v858, %v911
    %v917 = vld [vmem:[%s2] sm:$0x1]
    %v919 = vperm.slane %v917, 0
    %v921 = vadd.f32 %v913, %v919
    %v922 = vadd.f32 %v914, %v919
    %v923 = vadd.f32 %v915, %v919
    %v924 = vadd.f32 %v916, %v919
    %v925 = vmax.f32 %v921, 0.0
    %v926 = vmax.f32 %v922, 0.0
    %v927 = vmax.f32 %v923, 0.0
    %v928 = vmax.f32 %v924, 0.0
    %v929 = vld [vmem:[%s5] sm:$0x1]
    %v931 = vsel %vm240, %v929, 0
    %933 = vmatpush.msra.mxu0 0.0
    %934 = vmatpush.msra.mxu0 0.0
    %935 = vmatpush.msra.mxu0 0.0
    %936 = vmatpush.msra.mxu0 0.0
    %937 = vmatpush.msra.mxu0 0.0
    %938 = vmatpush.msra.mxu0 0.0
    %939 = vmatpush.msra.mxu0 0.0
    %940 = vmatpush.msra.mxu0 0.0
    %941 = vmatpush.msra.mxu0 0.0
    %942 = vmatpush.msra.mxu0 0.0
    %943 = vmatpush.msra.mxu0 0.0
    %944 = vmatpush.msra.mxu0 0.0
    %945 = vmatpush.msra.mxu0 %v928
    %946 = vmatpush.msra.mxu0 %v927
    %947 = vmatpush.msra.mxu0 %v926
    %948 = vmatpush.msra.mxu0 %v925
    %949 = vmatmul.f32.gmra.mxu0 %v931
    %v950 = vpop.f32.mrf.mxu0
    %v951 = vadd.f32 0.0, %v950
    %952 = vdwg.mxu0
    %v953 = vld [vmem:[%s6] sm:$0xff]
    %v954 = vld [vmem:[%s6 + $0x8] sm:$0xff]
    %v955 = vld [vmem:[%s6 + $0x10] sm:$0xff]
    %v956 = vld [vmem:[%s6 + $0x18] sm:$0xff]
    %v957 = vld [vmem:[%s6 + $0x20] sm:$0xff]
    %v958 = vld [vmem:[%s6 + $0x28] sm:$0xff]
    %v959 = vld [vmem:[%s6 + $0x30] sm:$0xff]
    %v960 = vld [vmem:[%s6 + $0x38] sm:$0xff]
    %v962 = vsel %vm46, %v951, 0
    %964 = vmatpush.msra.mxu0 0.0
    %965 = vmatpush.msra.mxu0 0.0
    %966 = vmatpush.msra.mxu0 0.0
    %967 = vmatpush.msra.mxu0 0.0
    %968 = vmatpush.msra.mxu0 0.0
    %969 = vmatpush.msra.mxu0 0.0
    %970 = vmatpush.msra.mxu0 0.0
    %971 = vmatpush.msra.mxu0 0.0
    %972 = vmatpush.msra.mxu0 %v960
    %973 = vmatpush.msra.mxu0 %v959
    %974 = vmatpush.msra.mxu0 %v958
    %975 = vmatpush.msra.mxu0 %v957
    %976 = vmatpush.msra.mxu0 %v956
    %977 = vmatpush.msra.mxu0 %v955
    %978 = vmatpush.msra.mxu0 %v954
    %979 = vmatpush.msra.mxu0 %v953
    %980 = vmatmul.f32.gmra.mxu0 %v962
    %v981 = vpop.f32.mrf.mxu0
    %v982 = vadd.f32 0.0, %v981
    %983 = vdwg.mxu0
    %v984 = vmul.f32 %v925, %v925
    %v985 = vmul.f32 %v926, %v926
    %v986 = vmul.f32 %v927, %v927
    %v987 = vmul.f32 %v928, %v928
    %988 = vmatpush.msra.mxu0 0.0
    %989 = vmatpush.msra.mxu0 0.0
    %990 = vmatpush.msra.mxu0 0.0
    %991 = vmatpush.msra.mxu0 0.0
    %992 = vmatpush.msra.mxu0 0.0
    %993 = vmatpush.msra.mxu0 0.0
    %994 = vmatpush.msra.mxu0 0.0
    %995 = vmatpush.msra.mxu0 0.0
    %996 = vmatpush.msra.mxu0 0.0
    %997 = vmatpush.msra.mxu0 0.0
    %998 = vmatpush.msra.mxu0 0.0
    %999 = vmatpush.msra.mxu0 0.0
    %1000 = vmatpush.msra.mxu0 %v987
    %1001 = vmatpush.msra.mxu0 %v986
    %1002 = vmatpush.msra.mxu0 %v985
    %1003 = vmatpush.msra.mxu0 %v984
    %1004 = vmatmul.f32.gmra.mxu0 %v931
    %v1005 = vpop.f32.mrf.mxu0
    %v1006 = vadd.f32 0.0, %v1005
    %1007 = vdwg.mxu0
    %v1009 = vsel %vm46, %v1006, 0
    %1011 = vmatpush.msra.mxu0 0.0
    %1012 = vmatpush.msra.mxu0 0.0
    %1013 = vmatpush.msra.mxu0 0.0
    %1014 = vmatpush.msra.mxu0 0.0
    %1015 = vmatpush.msra.mxu0 0.0
    %1016 = vmatpush.msra.mxu0 0.0
    %1017 = vmatpush.msra.mxu0 0.0
    %1018 = vmatpush.msra.mxu0 0.0
    %1019 = vmatpush.msra.mxu0 %v960
    %1020 = vmatpush.msra.mxu0 %v959
    %1021 = vmatpush.msra.mxu0 %v958
    %1022 = vmatpush.msra.mxu0 %v957
    %1023 = vmatpush.msra.mxu0 %v956
    %1024 = vmatpush.msra.mxu0 %v955
    %1025 = vmatpush.msra.mxu0 %v954
    %1026 = vmatpush.msra.mxu0 %v953
    %1027 = vmatmul.f32.gmra.mxu0 %v1009
    %v1028 = vpop.f32.mrf.mxu0
    %v1029 = vadd.f32 0.0, %v1028
    %1030 = vdwg.mxu0
    %v1031 = vmul.f32 %v982, 0.001953125
    %v1032 = vmul.f32 %v1029, 0.001953125
    %v1033 = vmul.f32 %v1031, %v1031
    %v1034 = vsub.f32 %v1032, %v1033
    %v1035 = vmax.f32 %v1034, 0.0
    %v1036 = vld [vmem:[%s3 + $0x2] sm:$0x1]
    %v1037 = vadd.f32 %v1035, 4.0
    %v1038 = vrsqrt.pop %v1037
    %v1039 = vmul.f32 %v1038, %v1037
    %v1040 = vmul.f32 %v1039, %v1038
    %v1041 = vmul.f32 0.5, %v1040
    %v1042 = vsub.f32 1.5, %v1041
    %v1043 = vmul.f32 %v1038, %v1042
    %vm1044 = vweird.f32 %v1037
    %vm1045 = vweird.f32 %v1038
    %vm1046 = vmor %vm1044, %vm1045
    %v1047 = vsel %vm1046, %v1038, %v1043
    %v1048 = vmul.f32 %v1036, %v1047
    %v1049 = vld [vmem:[%s4 + $0x2] sm:$0x1]
    %v1050 = vmul.f32 %v1031, %v1048
    %v1051 = vsub.f32 %v1049, %v1050
    %v1053 = vrot.slane %v1051, 7
    %v1055 = vsel %vm366, %v1048, %v1053
    %v1056 = vld [vmem:[%s7] sm:$0xf]
    %v1058 = vsel %vm369, %v1055, 0
    %v1061 = vsel %vm373, %v1056, 0
    %1063 = vmatpush.msra.mxu0 0.0
    %1064 = vmatpush.msra.mxu0 0.0
    %1065 = vmatpush.msra.mxu0 0.0
    %1066 = vmatpush.msra.mxu0 0.0
    %1067 = vmatpush.msra.mxu0 0.0
    %1068 = vmatpush.msra.mxu0 0.0
    %1069 = vmatpush.msra.mxu0 0.0
    %1070 = vmatpush.msra.mxu0 0.0
    %1071 = vmatpush.msra.mxu0 0.0
    %1072 = vmatpush.msra.mxu0 0.0
    %1073 = vmatpush.msra.mxu0 0.0
    %1074 = vmatpush.msra.mxu0 0.0
    %1075 = vmatpush.msra.mxu0 0.0
    %1076 = vmatpush.msra.mxu0 0.0
    %1077 = vmatpush.msra.mxu0 0.0
    %1078 = vmatpush.msra.mxu0 %v1061
    %1079 = vmatmul.f32.gmra.mxu0 %v1058
    %v1080 = vpop.f32.mrf.mxu0
    %v1081 = vadd.f32 0.0, %v1080
    %1082 = vdwg.mxu0
    %v1083 = vperm.slane %v1081, 0
    %v1084 = vmul.f32 %v925, %v1083
    %v1085 = vmul.f32 %v926, %v1083
    %v1086 = vmul.f32 %v927, %v1083
    %v1087 = vmul.f32 %v928, %v1083
    %v1088 = vperm.slane %v1081, 1
    %v1089 = vadd.f32 %v1084, %v1088
    %v1090 = vadd.f32 %v1085, %v1088
    %v1091 = vadd.f32 %v1086, %v1088
    %v1092 = vadd.f32 %v1087, %v1088
    %1093 = vst.msk [vmem:[#allocation6] sm:$0xff] %vm46, %v1089
    %1094 = vst.msk [vmem:[#allocation6 + $0x8] sm:$0xff] %vm46, %v1090
    %1095 = vst.msk [vmem:[#allocation6 + $0x10] sm:$0xff] %vm46, %v1091
    %1096 = vst.msk [vmem:[#allocation6 + $0x18] sm:$0xff] %vm46, %v1092
    // Predicated region
    $region38: #{tpu_custom_call.1} parent=1 // pred_check
      _
    $region39: #{tpu_custom_call.1} parent=1 // pred_check_branch
      %1098 = sbr.rel (0) target = $region41
    $region40: #{tpu_custom_call.1} parent=1 // pred_region
      %1100 = vsyncadd [#allocation5], 0
      %s1101 = sshll.u32 [#allocation6], 4
      %s1102 = int_to_ptr.vmem [resolvable:$true] %s1101
      %s1103 = sshll.u32 %s8, 4
      %s1104 = int_to_ptr.hbm [resolvable:$true] %s1103
      %1109 = dma.vmem_to_hbm [thread:$0]  %s1102, 512, %s1104, [#allocation5], 128, 128, 8
    $region41: #{tpu_custom_call.1} parent=1 // pred_fallthru
      _
    // Predicated region
    $region42: #{tpu_custom_call.1} parent=1 // pred_check
      _
    $region43: #{tpu_custom_call.1} parent=1 // pred_check_branch
      %1111 = sbr.rel (0) target = $region45
    $region44: #{tpu_custom_call.1} parent=1 // pred_region
      %1113 = dma.done [#allocation5], 512
    $region45: #{tpu_custom_call.1} parent=1 // pred_fallthru
      _
    %1114 = vsyncpa [#allocation4], 1
    %1115 = vsyncpa [#allocation5], 1

</llo_original>
